<compile_context>
chip_gen: v7x
topology: tpu7x:2x2x1
jax: 0.10.0
libtpu: 0.0.40
codegen_flags: <defaults>
</compile_context>

<pallas_src>
import numpy as np
import jax
import jax.numpy as jnp
from jax.experimental import pallas as pl
from jax.experimental.pallas import tpu as pltpu

_OUT_PAD = 128          # packed output width (lane-dense): [sent | resp | cris | w0 w1 | 0...]
_HID_PAD = 128          # attention hidden dim padded 64 -> 128
_FUSED = _HID_PAD + _OUT_PAD   # fused weight width: [attention | heads]


def _make_kernel(attn_off):
    """attn_off = n_sent + n_resp + n_cris (lane offset of the packed attention weights)."""

    def multitask_kernel(
        mask_ref,           # (TB, 1)   1.0 if history text present, else 0.0
        hist_ref,           # (TB, H)   history embeddings (compute dtype)
        curr_ref,           # (TB, H)   current embeddings (compute dtype)
        wfh_ref,            # (H, 256)  fused [w1_hist | heads]  (compute dtype)
        wfc_ref,            # (H, 256)  fused [w1_curr | heads]  (compute dtype)
        b1_ref,             # (1, 128)  attention hidden bias (f32, zero-padded)
        w2d_ref,            # (1, 128)  w2[:,0]-w2[:,1] difference row (f32, zero-padded)
        b2d_ref,            # (1, 1)    b2[0]-b2[1] (f32)
        bh_ref,             # (1, 128)  fused head bias (f32, zero at attn lanes)
        out_ref,            # (TB, 128) packed logits + attention weights (f32)
    ):
        curr = curr_ref[...]
        # history_rep[i] = current_rep[i] when history text is missing/empty
        hist = jnp.where(mask_ref[...] > 0.0, hist_ref[...], curr)

        # Two MXU pushes; everything after this is (TB, 128/256) f32.
        ph = jnp.dot(hist, wfh_ref[...], preferred_element_type=jnp.float32)   # (TB, 256)
        pc = jnp.dot(curr, wfc_ref[...], preferred_element_type=jnp.float32)   # (TB, 256)

        # attention MLP: Linear(2H, 64) -> tanh -> Linear(64, 2) (hidden padded to 128)
        hdn = jnp.tanh(ph[:, :_HID_PAD] + pc[:, :_HID_PAD] + b1_ref[...])
        # softmax over 2 slots == sigmoid of the score difference
        sdiff = jnp.sum(hdn * w2d_ref[...], axis=-1, keepdims=True) + b2d_ref[...]
        w0 = jax.nn.sigmoid(sdiff)                                              # (TB, 1)
        w1 = 1.0 - w0

        # attention blend done post-MXU on (TB, 128) head projections
        head_h = ph[:, _HID_PAD:]
        head_c = pc[:, _HID_PAD:]
        packed = head_c + w0 * (head_h - head_c) + bh_ref[...]

        # fold the attention weights into the (already-zero) spare lanes -> single store
        lane = jax.lax.broadcasted_iota(jnp.int32, (1, _OUT_PAD), 1)
        is0 = (lane == attn_off).astype(jnp.float32)
        is1 = (lane == attn_off + 1).astype(jnp.float32)
        packed = packed + w0 * is0 + w1 * is1

        out_ref[...] = packed.astype(out_ref.dtype)

    return multitask_kernel


def prepare_params(params, hidden_size, compute_dtype=jnp.bfloat16):
    """One-time weight prep: transpose to (in,out), split W1, pad to lane width, fuse the
    three heads with the attention halves into two (H, 256) matrices, and build the
    w2-difference row. compute_dtype controls the dtype of the MXU weight operands
    (and of the embeddings fed to the kernel)."""
    H = hidden_size
    cd = jnp.dtype(compute_dtype)

    w1 = jnp.asarray(params["w1"], jnp.float32).T                    # (2H, hid)
    hid = w1.shape[1]
    assert hid <= _HID_PAD
    w1h = jnp.zeros((H, _HID_PAD), jnp.float32).at[:, :hid].set(w1[:H])
    w1c = jnp.zeros((H, _HID_PAD), jnp.float32).at[:, :hid].set(w1[H:])
    b1 = jnp.zeros((1, _HID_PAD), jnp.float32).at[:, :hid].set(
        jnp.asarray(params["b1"], jnp.float32).reshape(1, -1))

    w2 = jnp.asarray(params["w2"], jnp.float32)                      # (2, hid)
    w2d = jnp.zeros((1, _HID_PAD), jnp.float32).at[:, :hid].set(
        (w2[0] - w2[1]).reshape(1, -1))
    b2 = jnp.asarray(params["b2"], jnp.float32).reshape(-1)
    b2d = (b2[0] - b2[1]).reshape(1, 1)

    ws = jnp.asarray(params["ws"], jnp.float32).T                    # (H, n_sent)
    wr = jnp.asarray(params["wr"], jnp.float32).T                    # (H, n_resp)
    wc = jnp.asarray(params["wc"], jnp.float32).T                    # (H, n_cris)
    n_sent, n_resp, n_cris = ws.shape[1], wr.shape[1], wc.shape[1]
    n_heads = n_sent + n_resp + n_cris
    assert n_heads + 2 <= _OUT_PAD

    wh = jnp.zeros((H, _OUT_PAD), jnp.float32)
    wh = wh.at[:, 0:n_sent].set(ws)
    wh = wh.at[:, n_sent:n_sent + n_resp].set(wr)
    wh = wh.at[:, n_sent + n_resp:n_heads].set(wc)
    bh = jnp.zeros((1, _OUT_PAD), jnp.float32)
    bh = bh.at[:, 0:n_sent].set(jnp.asarray(params["bs"], jnp.float32).reshape(1, -1))
    bh = bh.at[:, n_sent:n_sent + n_resp].set(
        jnp.asarray(params["br"], jnp.float32).reshape(1, -1))
    bh = bh.at[:, n_sent + n_resp:n_heads].set(
        jnp.asarray(params["bc"], jnp.float32).reshape(1, -1))

    wfh = jnp.concatenate([w1h, wh], axis=1).astype(cd)              # (H, 256)
    wfc = jnp.concatenate([w1c, wh], axis=1).astype(cd)              # (H, 256)

    return {
        "wfh": wfh, "wfc": wfc, "b1": b1, "w2d": w2d, "b2d": b2d, "bh": bh,
        "n_sent": n_sent, "n_resp": n_resp, "n_cris": n_cris,
        "attn_off": n_heads, "compute_dtype": cd, "hidden_size": H,
    }


def _vmem_capacity_bytes():
    try:
        return int(pltpu.get_tpu_info().vmem_capacity_bytes)
    except Exception:
        return 64 * 1024 * 1024   # conservative (v7x) fallback


def multitask_forward(history_rep, current_rep, has_history_mask, prep, *, block_b=None):
    """Pallas-backed forward of MultitaskClassifier (post-encoder part).

    history_rep, current_rep : (B, H) float (ideally already in prep['compute_dtype'] so the
                               wrapper cast does not add an extra HBM pass)
    has_history_mask         : (B,)   1.0 if history text present, else 0.0
    prep                     : output of prepare_params()
    """
    history_rep = jnp.asarray(history_rep)
    current_rep = jnp.asarray(current_rep)
    B, H = history_rep.shape
    assert H == prep["hidden_size"]
    cd = prep["compute_dtype"]
    itm = jnp.dtype(cd).itemsize

    hist = history_rep if history_rep.dtype == cd else history_rep.astype(cd)
    curr = current_rep if current_rep.dtype == cd else current_rep.astype(cd)
    mask = jnp.asarray(has_history_mask, jnp.float32).reshape(B, 1)

    weights = [prep["wfh"], prep["wfc"], prep["b1"], prep["w2d"], prep["b2d"], prep["bh"]]
    weight_bytes = sum(int(np.prod(w.shape)) * w.dtype.itemsize for w in weights)

    # --- VMEM-driven batch-tile sizing (includes in-kernel temporaries) ---
    vmem_budget = int(0.75 * _vmem_capacity_bytes())        # leave compiler headroom
    per_row = (
        2 * 2 * H * itm          # double-buffered hist + curr input tiles
        + H * itm                # masked-history temporary fed to the MXU
        + 2 * _FUSED * 4         # ph, pc (row, 256) f32
        + 2 * _OUT_PAD * 4       # hdn / packed (row, 128) f32
        + 2 * _OUT_PAD * 4       # double-buffered f32 output tile
        + 8                      # mask
    )
    round8 = lambda n: max(8, -(-int(n) // 8) * 8)
    if block_b is None:
        avail = vmem_budget - 2 * weight_bytes - (2 << 20)
        TB = max(8, min(1024, (avail // per_row) // 8 * 8))
    else:
        TB = round8(block_b)
    TB = min(TB, round8(B))
    num_tiles = -(-B // TB)       # ragged last block handled by Pallas (no host jnp.pad)

    vmem_limit = TB * per_row + 2 * weight_bytes + (2 << 20)
    vmem_limit = int(max(32 * 1024 * 1024, min(vmem_budget, vmem_limit)))

    out_shape = jax.ShapeDtypeStruct((B, _OUT_PAD), jnp.float32)

    def build(single_buffer_weights):
        wkwargs = dict(pipeline_mode=pl.Buffered(1)) if single_buffer_weights else {}
        in_specs = (
            [pl.BlockSpec((TB, 1), lambda i: (i, 0)),
             pl.BlockSpec((TB, H), lambda i: (i, 0)),
             pl.BlockSpec((TB, H), lambda i: (i, 0))]
            # resident weights: constant index_map -> stay in VMEM across grid steps
            + [pl.BlockSpec(w.shape, lambda i: (0, 0), **wkwargs) for w in weights]
        )
        return pl.pallas_call(
            _make_kernel(prep["attn_off"]),
            out_shape=out_shape,
            grid=(num_tiles,),
            in_specs=in_specs,
            out_specs=pl.BlockSpec((TB, _OUT_PAD), lambda i: (i, 0)),
            compiler_params=pltpu.CompilerParams(
                dimension_semantics=("parallel",),
                vmem_limit_bytes=vmem_limit,
            ),
        )

    try:
        out = build(True)(mask, hist, curr, *weights)
    except Exception:
        # pipeline_mode=pl.Buffered(1) not supported on this jax version -> default buffering
        out = build(False)(mask, hist, curr, *weights)

    ns, nr = prep["n_sent"], prep["n_resp"]
    a = prep["attn_off"]
    sent = out[:, 0:ns]
    resp = out[:, ns:ns + nr]
    cris = out[:, ns + nr:a]
    attn = out[:, a:a + 2]
    return sent, resp, cris, attn


def reference_forward(history_rep, current_rep, mask, params):
    hist = jnp.where(mask[:, None] > 0, history_rep, current_rep)
    cat = jnp.concatenate([hist, current_rep], axis=1)
    hdn = jnp.tanh(cat @ params["w1"].T + params["b1"])
    scores = hdn @ params["w2"].T + params["b2"]
    w = jax.nn.softmax(scores, axis=1)
    combined = hist * w[:, 0:1] + current_rep * w[:, 1:2]
    sent = combined @ params["ws"].T + params["bs"]
    resp = combined @ params["wr"].T + params["br"]
    cris = combined @ params["wc"].T + params["bc"]
    return sent, resp, cris, w


if __name__ == "__main__":
    B = 16           # batch (two tiles of 8 -> exercises the batch grid)
    H = 128          # hidden_size (small stand-in for 4096)
    N_SENT, N_RESP, N_CRIS = 3, 2, 2

    key = jax.random.PRNGKey(0)
    ks = jax.random.split(key, 12)

    # deterministic "encoder outputs"
    history_rep = jax.random.normal(ks[0], (B, H), jnp.float32)
    current_rep = jax.random.normal(ks[1], (B, H), jnp.float32)
    # some examples have no history text -> fall back to current
    has_history = jnp.array([1, 1, 0, 1, 1, 0, 1, 1, 0, 1, 1, 1, 0, 1, 1, 1], jnp.float32)

    # deterministic parameters in PyTorch nn.Linear convention: W (out,in), b (out,)
    s = 0.05
    params = {
        "w1": s * jax.random.normal(ks[2], (64, 2 * H), jnp.float32),
        "b1": s * jax.random.normal(ks[3], (64,), jnp.float32),
        "w2": s * jax.random.normal(ks[4], (2, 64), jnp.float32),
        "b2": s * jax.random.normal(ks[5], (2,), jnp.float32),
        "ws": s * jax.random.normal(ks[6], (N_SENT, H), jnp.float32),
        "bs": s * jax.random.normal(ks[7], (N_SENT,), jnp.float32),
        "wr": s * jax.random.normal(ks[8], (N_RESP, H), jnp.float32),
        "br": s * jax.random.normal(ks[9], (N_RESP,), jnp.float32),
        "wc": s * jax.random.normal(ks[10], (N_CRIS, H), jnp.float32),
        "bc": s * jax.random.normal(ks[11], (N_CRIS,), jnp.float32),
    }

    refs = jax.block_until_ready(
        reference_forward(history_rep, current_rep, has_history, params))

    # --- f32 compute path: tight check, two full tiles ---
    prep_f32 = prepare_params(params, H, compute_dtype=jnp.float32)
    outs = jax.block_until_ready(
        multitask_forward(history_rep, current_rep, has_history, prep_f32, block_b=8))
    for o, r in zip(outs, refs):
        np.testing.assert_allclose(np.asarray(o), np.asarray(r), rtol=1e-3, atol=1e-3)

    # --- ragged last block (B=11 with TB=8): exercises non-divisible batch, no host pad ---
    Br = 11
    outs_r = jax.block_until_ready(
        multitask_forward(history_rep[:Br], current_rep[:Br], has_history[:Br],
                          prep_f32, block_b=8))
    for o, r in zip(outs_r, refs):
        np.testing.assert_allclose(np.asarray(o), np.asarray(r)[:Br], rtol=1e-3, atol=1e-3)

    # --- bf16 (default) path: embeddings + MXU weight operands in bf16, f32 accumulate ---
    prep_bf16 = prepare_params(params, H)   # compute_dtype defaults to bf16
    outs_bf16 = jax.block_until_ready(
        multitask_forward(history_rep, current_rep, has_history, prep_bf16, block_b=8))
    for o, r in zip(outs_bf16, refs):
        np.testing.assert_allclose(np.asarray(o), np.asarray(r), rtol=5e-2, atol=5e-2)

    # --- auto VMEM-driven tile sizing path (no block_b) ---
    outs_auto = jax.block_until_ready(
        multitask_forward(history_rep, current_rep, has_history, prep_bf16))
    for o, r in zip(outs_auto, refs):
        np.testing.assert_allclose(np.asarray(o), np.asarray(r), rtol=5e-2, atol=5e-2)

    print("KERNEL_OK")
</pallas_src>

<mosaic_0001>
module attributes {stable_mosaic.version = 11 : i64} {
  func.func @multitask_kernel(%arg0: i32, %arg1: memref<8x1xf32, #tpu.memory_space<vmem>>, %arg2: memref<8x128xf32, #tpu.memory_space<vmem>>, %arg3: memref<8x128xf32, #tpu.memory_space<vmem>>, %arg4: memref<128x256xf32, #tpu.memory_space<vmem>>, %arg5: memref<128x256xf32, #tpu.memory_space<vmem>>, %arg6: memref<1x128xf32, #tpu.memory_space<vmem>>, %arg7: memref<1x128xf32, #tpu.memory_space<vmem>>, %arg8: memref<1x1xf32, #tpu.memory_space<vmem>>, %arg9: memref<1x128xf32, #tpu.memory_space<vmem>>, %arg10: memref<8x128xf32, #tpu.memory_space<vmem>>) attributes {dimension_semantics = [#tpu.dimension_semantics<parallel>], iteration_bounds = array<i64: 2>, scalar_prefetch = 0 : i64, scratch_operands = 0 : i64, tpu.core_type = #tpu.core_type<tc>, window_params = [{transform_indices = @transform_0, window_bounds = array<i64: 8, 1>}, {transform_indices = @transform_1, window_bounds = array<i64: 8, 128>}, {transform_indices = @transform_2, window_bounds = array<i64: 8, 128>}, {pipeline_mode = #tpu.pipeline_mode<synchronous>, transform_indices = @transform_3, window_bounds = array<i64: 128, 256>}, {pipeline_mode = #tpu.pipeline_mode<synchronous>, transform_indices = @transform_4, window_bounds = array<i64: 128, 256>}, {pipeline_mode = #tpu.pipeline_mode<synchronous>, transform_indices = @transform_5, window_bounds = array<i64: 1, 128>}, {pipeline_mode = #tpu.pipeline_mode<synchronous>, transform_indices = @transform_6, window_bounds = array<i64: 1, 128>}, {pipeline_mode = #tpu.pipeline_mode<synchronous>, transform_indices = @transform_7, window_bounds = array<i64: 1, 1>}, {pipeline_mode = #tpu.pipeline_mode<synchronous>, transform_indices = @transform_8, window_bounds = array<i64: 1, 128>}, {transform_indices = @transform_9, window_bounds = array<i64: 8, 128>}]} {
    %c0 = arith.constant 0 : index
    %c0_0 = arith.constant 0 : index
    %0 = vector.load %arg3[%c0, %c0_0] : memref<8x128xf32, #tpu.memory_space<vmem>>, vector<8x128xf32>
    %c0_1 = arith.constant 0 : index
    %c0_2 = arith.constant 0 : index
    %1 = vector.load %arg1[%c0_1, %c0_2] : memref<8x1xf32, #tpu.memory_space<vmem>>, vector<8x1xf32>
    %cst = arith.constant 0.000000e+00 : f32
    %2 = vector.broadcast %cst : f32 to vector<8x1xf32>
    %3 = arith.cmpf ogt, %1, %2 : vector<8x1xf32>
    %c0_3 = arith.constant 0 : index
    %c0_4 = arith.constant 0 : index
    %4 = vector.load %arg2[%c0_3, %c0_4] : memref<8x128xf32, #tpu.memory_space<vmem>>, vector<8x128xf32>
    %5 = vector.shape_cast %3 : vector<8x1xi1> to vector<8x1xi1>
    %6 = vector.broadcast %5 : vector<8x1xi1> to vector<8x128xi1>
    %7 = arith.select %6, %4, %0 : vector<8x128xi1>, vector<8x128xf32>
    %c0_5 = arith.constant 0 : index
    %c0_6 = arith.constant 0 : index
    %8 = vector.load %arg4[%c0_5, %c0_6] : memref<128x256xf32, #tpu.memory_space<vmem>>, vector<128x256xf32>
    %cst_7 = arith.constant dense<0.000000e+00> : vector<8x256xf32>
    %9 = tpu.matmul %7, %8, %cst_7 {dimension_numbers = #tpu.dot_dimension_numbers<[1], [0], [0], [1], [0, 0, 1, 1], [], []>} : vector<8x128xf32>, vector<128x256xf32>, vector<8x256xf32> -> vector<8x256xf32>
    %c0_8 = arith.constant 0 : index
    %c0_9 = arith.constant 0 : index
    %10 = vector.load %arg5[%c0_8, %c0_9] : memref<128x256xf32, #tpu.memory_space<vmem>>, vector<128x256xf32>
    %cst_10 = arith.constant dense<0.000000e+00> : vector<8x256xf32>
    %11 = tpu.matmul %0, %10, %cst_10 {dimension_numbers = #tpu.dot_dimension_numbers<[1], [0], [0], [1], [0, 0, 1, 1], [], []>} : vector<8x128xf32>, vector<128x256xf32>, vector<8x256xf32> -> vector<8x256xf32>
    %12 = vector.extract_strided_slice %9 {offsets = [0, 0], sizes = [8, 128], strides = [1, 1]} : vector<8x256xf32> to vector<8x128xf32>
    %13 = vector.extract_strided_slice %11 {offsets = [0, 0], sizes = [8, 128], strides = [1, 1]} : vector<8x256xf32> to vector<8x128xf32>
    %14 = arith.addf %12, %13 : vector<8x128xf32>
    %c0_11 = arith.constant 0 : index
    %c0_12 = arith.constant 0 : index
    %15 = vector.load %arg6[%c0_11, %c0_12] : memref<1x128xf32, #tpu.memory_space<vmem>>, vector<1x128xf32>
    %16 = vector.broadcast %15 : vector<1x128xf32> to vector<8x128xf32>
    %17 = arith.addf %14, %16 : vector<8x128xf32>
    %18 = math.tanh %17 : vector<8x128xf32>
    %c0_13 = arith.constant 0 : index
    %c0_14 = arith.constant 0 : index
    %19 = vector.load %arg7[%c0_13, %c0_14] : memref<1x128xf32, #tpu.memory_space<vmem>>, vector<1x128xf32>
    %20 = vector.broadcast %19 : vector<1x128xf32> to vector<8x128xf32>
    %21 = arith.mulf %18, %20 : vector<8x128xf32>
    %cst_15 = arith.constant dense<0.000000e+00> : vector<8xf32>
    %22 = vector.multi_reduction <add>, %21, %cst_15 [1] : vector<8x128xf32> to vector<8xf32>
    %23 = vector.shape_cast %22 : vector<8xf32> to vector<8x1xf32>
    %c0_16 = arith.constant 0 : index
    %c0_17 = arith.constant 0 : index
    %24 = vector.load %arg8[%c0_16, %c0_17] : memref<1x1xf32, #tpu.memory_space<vmem>>, vector<1x1xf32>
    %25 = vector.broadcast %24 : vector<1x1xf32> to vector<8x1xf32>
    %26 = arith.addf %23, %25 : vector<8x1xf32>
    %27 = arith.negf %26 : vector<8x1xf32>
    %28 = math.exp %27 : vector<8x1xf32>
    %cst_18 = arith.constant 1.000000e+00 : f32
    %29 = vector.broadcast %cst_18 : f32 to vector<8x1xf32>
    %30 = arith.addf %29, %28 : vector<8x1xf32>
    %31 = arith.divf %29, %30 : vector<8x1xf32>
    %cst_19 = arith.constant 1.000000e+00 : f32
    %32 = vector.broadcast %cst_19 : f32 to vector<8x1xf32>
    %33 = arith.subf %32, %31 : vector<8x1xf32>
    %34 = vector.extract_strided_slice %9 {offsets = [0, 128], sizes = [8, 128], strides = [1, 1]} : vector<8x256xf32> to vector<8x128xf32>
    %35 = vector.extract_strided_slice %11 {offsets = [0, 128], sizes = [8, 128], strides = [1, 1]} : vector<8x256xf32> to vector<8x128xf32>
    %36 = arith.subf %34, %35 : vector<8x128xf32>
    %37 = vector.broadcast %31 : vector<8x1xf32> to vector<8x128xf32>
    %38 = arith.mulf %37, %36 : vector<8x128xf32>
    %39 = arith.addf %35, %38 : vector<8x128xf32>
    %c0_20 = arith.constant 0 : index
    %c0_21 = arith.constant 0 : index
    %40 = vector.load %arg9[%c0_20, %c0_21] : memref<1x128xf32, #tpu.memory_space<vmem>>, vector<1x128xf32>
    %41 = vector.broadcast %40 : vector<1x128xf32> to vector<8x128xf32>
    %42 = arith.addf %39, %41 : vector<8x128xf32>
    %43 = tpu.iota {dimensions = array<i32: 1>} : vector<1x128xi32>
    %c7_i32 = arith.constant 7 : i32
    %44 = vector.broadcast %c7_i32 : i32 to vector<1x128xi32>
    %45 = arith.cmpi eq, %43, %44 : vector<1x128xi32>
    %46 = arith.extui %45 : vector<1x128xi1> to vector<1x128xi32>
    %47 = arith.sitofp %46 : vector<1x128xi32> to vector<1x128xf32>
    %c8_i32 = arith.constant 8 : i32
    %48 = vector.broadcast %c8_i32 : i32 to vector<1x128xi32>
    %49 = arith.cmpi eq, %43, %48 : vector<1x128xi32>
    %50 = arith.extui %49 : vector<1x128xi1> to vector<1x128xi32>
    %51 = arith.sitofp %50 : vector<1x128xi32> to vector<1x128xf32>
    %52 = vector.broadcast %31 : vector<8x1xf32> to vector<8x128xf32>
    %53 = vector.broadcast %47 : vector<1x128xf32> to vector<8x128xf32>
    %54 = arith.mulf %52, %53 : vector<8x128xf32>
    %55 = arith.addf %42, %54 : vector<8x128xf32>
    %56 = vector.broadcast %33 : vector<8x1xf32> to vector<8x128xf32>
    %57 = vector.broadcast %51 : vector<1x128xf32> to vector<8x128xf32>
    %58 = arith.mulf %56, %57 : vector<8x128xf32>
    %59 = arith.addf %55, %58 : vector<8x128xf32>
    %c0_22 = arith.constant 0 : index
    %c0_23 = arith.constant 0 : index
    %60 = vector.load %arg10[%c0_22, %c0_23] : memref<8x128xf32, #tpu.memory_space<vmem>>, vector<8x128xf32>
    tpu.vector_store %arg10[%c0_22, %c0_23], %59 {strides = array<i32>} : memref<8x128xf32, #tpu.memory_space<vmem>>, vector<8x128xf32>,
    return
  }
  func.func @transform_0(%arg0: i32) -> (i32, i32) {
    %c0_i32 = arith.constant 0 : i32
    %c0_i32_0 = arith.constant 0 : i32
    return %arg0, %c0_i32 : i32, i32
  }
  func.func @transform_1(%arg0: i32) -> (i32, i32) {
    %c0_i32 = arith.constant 0 : i32
    %c0_i32_0 = arith.constant 0 : i32
    return %arg0, %c0_i32 : i32, i32
  }
  func.func @transform_2(%arg0: i32) -> (i32, i32) {
    %c0_i32 = arith.constant 0 : i32
    %c0_i32_0 = arith.constant 0 : i32
    return %arg0, %c0_i32 : i32, i32
  }
  func.func @transform_3(%arg0: i32) -> (i32, i32) {
    %c0_i32 = arith.constant 0 : i32
    %c0_i32_0 = arith.constant 0 : i32
    %c0_i32_1 = arith.constant 0 : i32
    return %c0_i32, %c0_i32_0 : i32, i32
  }
  func.func @transform_4(%arg0: i32) -> (i32, i32) {
    %c0_i32 = arith.constant 0 : i32
    %c0_i32_0 = arith.constant 0 : i32
    %c0_i32_1 = arith.constant 0 : i32
    return %c0_i32, %c0_i32_0 : i32, i32
  }
  func.func @transform_5(%arg0: i32) -> (i32, i32) {
    %c0_i32 = arith.constant 0 : i32
    %c0_i32_0 = arith.constant 0 : i32
    %c0_i32_1 = arith.constant 0 : i32
    return %c0_i32, %c0_i32_0 : i32, i32
  }
  func.func @transform_6(%arg0: i32) -> (i32, i32) {
    %c0_i32 = arith.constant 0 : i32
    %c0_i32_0 = arith.constant 0 : i32
    %c0_i32_1 = arith.constant 0 : i32
    return %c0_i32, %c0_i32_0 : i32, i32
  }
  func.func @transform_7(%arg0: i32) -> (i32, i32) {
    %c0_i32 = arith.constant 0 : i32
    %c0_i32_0 = arith.constant 0 : i32
    %c0_i32_1 = arith.constant 0 : i32
    return %c0_i32, %c0_i32_0 : i32, i32
  }
  func.func @transform_8(%arg0: i32) -> (i32, i32) {
    %c0_i32 = arith.constant 0 : i32
    %c0_i32_0 = arith.constant 0 : i32
    %c0_i32_1 = arith.constant 0 : i32
    return %c0_i32, %c0_i32_0 : i32, i32
  }
  func.func @transform_9(%arg0: i32) -> (i32, i32) {
    %c0_i32 = arith.constant 0 : i32
    %c0_i32_0 = arith.constant 0 : i32
    return %arg0, %c0_i32 : i32, i32
  }
}

module attributes {stable_mosaic.version = 11 : i64} {
  func.func @multitask_kernel(%arg0: i32, %arg1: memref<8x1xf32, #tpu.memory_space<vmem>>, %arg2: memref<8x128xf32, #tpu.memory_space<vmem>>, %arg3: memref<8x128xf32, #tpu.memory_space<vmem>>, %arg4: memref<128x256xf32, #tpu.memory_space<vmem>>, %arg5: memref<128x256xf32, #tpu.memory_space<vmem>>, %arg6: memref<1x128xf32, #tpu.memory_space<vmem>>, %arg7: memref<1x128xf32, #tpu.memory_space<vmem>>, %arg8: memref<1x1xf32, #tpu.memory_space<vmem>>, %arg9: memref<1x128xf32, #tpu.memory_space<vmem>>, %arg10: memref<8x128xf32, #tpu.memory_space<vmem>>) attributes {dimension_semantics = [#tpu.dimension_semantics<parallel>], iteration_bounds = array<i64: 2>, scalar_prefetch = 0 : i64, scratch_operands = 0 : i64, tpu.core_type = #tpu.core_type<tc>, window_params = [{transform_indices = @transform_0, window_bounds = array<i64: 8, 1>}, {transform_indices = @transform_1, window_bounds = array<i64: 8, 128>}, {transform_indices = @transform_2, window_bounds = array<i64: 8, 128>}, {pipeline_mode = #tpu.pipeline_mode<synchronous>, transform_indices = @transform_3, window_bounds = array<i64: 128, 256>}, {pipeline_mode = #tpu.pipeline_mode<synchronous>, transform_indices = @transform_4, window_bounds = array<i64: 128, 256>}, {pipeline_mode = #tpu.pipeline_mode<synchronous>, transform_indices = @transform_5, window_bounds = array<i64: 1, 128>}, {pipeline_mode = #tpu.pipeline_mode<synchronous>, transform_indices = @transform_6, window_bounds = array<i64: 1, 128>}, {pipeline_mode = #tpu.pipeline_mode<synchronous>, transform_indices = @transform_7, window_bounds = array<i64: 1, 1>}, {pipeline_mode = #tpu.pipeline_mode<synchronous>, transform_indices = @transform_8, window_bounds = array<i64: 1, 128>}, {transform_indices = @transform_9, window_bounds = array<i64: 8, 128>}]} {
    %c0 = arith.constant 0 : index
    %c0_0 = arith.constant 0 : index
    %0 = vector.load %arg3[%c0, %c0_0] : memref<8x128xf32, #tpu.memory_space<vmem>>, vector<8x128xf32>
    %c0_1 = arith.constant 0 : index
    %c0_2 = arith.constant 0 : index
    %1 = vector.load %arg1[%c0_1, %c0_2] : memref<8x1xf32, #tpu.memory_space<vmem>>, vector<8x1xf32>
    %cst = arith.constant 0.000000e+00 : f32
    %2 = vector.broadcast %cst : f32 to vector<8x1xf32>
    %3 = arith.cmpf ogt, %1, %2 : vector<8x1xf32>
    %c0_3 = arith.constant 0 : index
    %c0_4 = arith.constant 0 : index
    %4 = vector.load %arg2[%c0_3, %c0_4] : memref<8x128xf32, #tpu.memory_space<vmem>>, vector<8x128xf32>
    %5 = vector.shape_cast %3 : vector<8x1xi1> to vector<8x1xi1>
    %6 = vector.broadcast %5 : vector<8x1xi1> to vector<8x128xi1>
    %7 = arith.select %6, %4, %0 : vector<8x128xi1>, vector<8x128xf32>
    %c0_5 = arith.constant 0 : index
    %c0_6 = arith.constant 0 : index
    %8 = vector.load %arg4[%c0_5, %c0_6] : memref<128x256xf32, #tpu.memory_space<vmem>>, vector<128x256xf32>
    %cst_7 = arith.constant dense<0.000000e+00> : vector<8x256xf32>
    %9 = tpu.matmul %7, %8, %cst_7 {dimension_numbers = #tpu.dot_dimension_numbers<[1], [0], [0], [1], [0, 0, 1, 1], [], []>} : vector<8x128xf32>, vector<128x256xf32>, vector<8x256xf32> -> vector<8x256xf32>
    %c0_8 = arith.constant 0 : index
    %c0_9 = arith.constant 0 : index
    %10 = vector.load %arg5[%c0_8, %c0_9] : memref<128x256xf32, #tpu.memory_space<vmem>>, vector<128x256xf32>
    %cst_10 = arith.constant dense<0.000000e+00> : vector<8x256xf32>
    %11 = tpu.matmul %0, %10, %cst_10 {dimension_numbers = #tpu.dot_dimension_numbers<[1], [0], [0], [1], [0, 0, 1, 1], [], []>} : vector<8x128xf32>, vector<128x256xf32>, vector<8x256xf32> -> vector<8x256xf32>
    %12 = vector.extract_strided_slice %9 {offsets = [0, 0], sizes = [8, 128], strides = [1, 1]} : vector<8x256xf32> to vector<8x128xf32>
    %13 = vector.extract_strided_slice %11 {offsets = [0, 0], sizes = [8, 128], strides = [1, 1]} : vector<8x256xf32> to vector<8x128xf32>
    %14 = arith.addf %12, %13 : vector<8x128xf32>
    %c0_11 = arith.constant 0 : index
    %c0_12 = arith.constant 0 : index
    %15 = vector.load %arg6[%c0_11, %c0_12] : memref<1x128xf32, #tpu.memory_space<vmem>>, vector<1x128xf32>
    %16 = vector.broadcast %15 : vector<1x128xf32> to vector<8x128xf32>
    %17 = arith.addf %14, %16 : vector<8x128xf32>
    %18 = math.tanh %17 : vector<8x128xf32>
    %c0_13 = arith.constant 0 : index
    %c0_14 = arith.constant 0 : index
    %19 = vector.load %arg7[%c0_13, %c0_14] : memref<1x128xf32, #tpu.memory_space<vmem>>, vector<1x128xf32>
    %20 = vector.broadcast %19 : vector<1x128xf32> to vector<8x128xf32>
    %21 = arith.mulf %18, %20 : vector<8x128xf32>
    %cst_15 = arith.constant dense<0.000000e+00> : vector<8xf32>
    %22 = vector.multi_reduction <add>, %21, %cst_15 [1] : vector<8x128xf32> to vector<8xf32>
    %23 = vector.shape_cast %22 : vector<8xf32> to vector<8x1xf32>
    %c0_16 = arith.constant 0 : index
    %c0_17 = arith.constant 0 : index
    %24 = vector.load %arg8[%c0_16, %c0_17] : memref<1x1xf32, #tpu.memory_space<vmem>>, vector<1x1xf32>
    %25 = vector.broadcast %24 : vector<1x1xf32> to vector<8x1xf32>
    %26 = arith.addf %23, %25 : vector<8x1xf32>
    %27 = arith.negf %26 : vector<8x1xf32>
    %28 = math.exp %27 : vector<8x1xf32>
    %cst_18 = arith.constant 1.000000e+00 : f32
    %29 = vector.broadcast %cst_18 : f32 to vector<8x1xf32>
    %30 = arith.addf %29, %28 : vector<8x1xf32>
    %31 = arith.divf %29, %30 : vector<8x1xf32>
    %cst_19 = arith.constant 1.000000e+00 : f32
    %32 = vector.broadcast %cst_19 : f32 to vector<8x1xf32>
    %33 = arith.subf %32, %31 : vector<8x1xf32>
    %34 = vector.extract_strided_slice %9 {offsets = [0, 128], sizes = [8, 128], strides = [1, 1]} : vector<8x256xf32> to vector<8x128xf32>
    %35 = vector.extract_strided_slice %11 {offsets = [0, 128], sizes = [8, 128], strides = [1, 1]} : vector<8x256xf32> to vector<8x128xf32>
    %36 = arith.subf %34, %35 : vector<8x128xf32>
    %37 = vector.broadcast %31 : vector<8x1xf32> to vector<8x128xf32>
    %38 = arith.mulf %37, %36 : vector<8x128xf32>
    %39 = arith.addf %35, %38 : vector<8x128xf32>
    %c0_20 = arith.constant 0 : index
    %c0_21 = arith.constant 0 : index
    %40 = vector.load %arg9[%c0_20, %c0_21] : memref<1x128xf32, #tpu.memory_space<vmem>>, vector<1x128xf32>
    %41 = vector.broadcast %40 : vector<1x128xf32> to vector<8x128xf32>
    %42 = arith.addf %39, %41 : vector<8x128xf32>
    %43 = tpu.iota {dimensions = array<i32: 1>} : vector<1x128xi32>
    %c7_i32 = arith.constant 7 : i32
    %44 = vector.broadcast %c7_i32 : i32 to vector<1x128xi32>
    %45 = arith.cmpi eq, %43, %44 : vector<1x128xi32>
    %46 = arith.extui %45 : vector<1x128xi1> to vector<1x128xi32>
    %47 = arith.sitofp %46 : vector<1x128xi32> to vector<1x128xf32>
    %c8_i32 = arith.constant 8 : i32
    %48 = vector.broadcast %c8_i32 : i32 to vector<1x128xi32>
    %49 = arith.cmpi eq, %43, %48 : vector<1x128xi32>
    %50 = arith.extui %49 : vector<1x128xi1> to vector<1x128xi32>
    %51 = arith.sitofp %50 : vector<1x128xi32> to vector<1x128xf32>
    %52 = vector.broadcast %31 : vector<8x1xf32> to vector<8x128xf32>
    %53 = vector.broadcast %47 : vector<1x128xf32> to vector<8x128xf32>
    %54 = arith.mulf %52, %53 : vector<8x128xf32>
    %55 = arith.addf %42, %54 : vector<8x128xf32>
    %56 = vector.broadcast %33 : vector<8x1xf32> to vector<8x128xf32>
    %57 = vector.broadcast %51 : vector<1x128xf32> to vector<8x128xf32>
    %58 = arith.mulf %56, %57 : vector<8x128xf32>
    %59 = arith.addf %55, %58 : vector<8x128xf32>
    %c0_22 = arith.constant 0 : index
    %c0_23 = arith.constant 0 : index
    %60 = vector.load %arg10[%c0_22, %c0_23] : memref<8x128xf32, #tpu.memory_space<vmem>>, vector<8x128xf32>
    tpu.vector_store %arg10[%c0_22, %c0_23], %59 {strides = array<i32>} : memref<8x128xf32, #tpu.memory_space<vmem>>, vector<8x128xf32>,
    return
  }
  func.func @transform_0(%arg0: i32) -> (i32, i32) {
    %c0_i32 = arith.constant 0 : i32
    %c0_i32_0 = arith.constant 0 : i32
    return %arg0, %c0_i32 : i32, i32
  }
  func.func @transform_1(%arg0: i32) -> (i32, i32) {
    %c0_i32 = arith.constant 0 : i32
    %c0_i32_0 = arith.constant 0 : i32
    return %arg0, %c0_i32 : i32, i32
  }
  func.func @transform_2(%arg0: i32) -> (i32, i32) {
    %c0_i32 = arith.constant 0 : i32
    %c0_i32_0 = arith.constant 0 : i32
    return %arg0, %c0_i32 : i32, i32
  }
  func.func @transform_3(%arg0: i32) -> (i32, i32) {
    %c0_i32 = arith.constant 0 : i32
    %c0_i32_0 = arith.constant 0 : i32
    %c0_i32_1 = arith.constant 0 : i32
    return %c0_i32, %c0_i32_0 : i32, i32
  }
  func.func @transform_4(%arg0: i32) -> (i32, i32) {
    %c0_i32 = arith.constant 0 : i32
    %c0_i32_0 = arith.constant 0 : i32
    %c0_i32_1 = arith.constant 0 : i32
    return %c0_i32, %c0_i32_0 : i32, i32
  }
  func.func @transform_5(%arg0: i32) -> (i32, i32) {
    %c0_i32 = arith.constant 0 : i32
    %c0_i32_0 = arith.constant 0 : i32
    %c0_i32_1 = arith.constant 0 : i32
    return %c0_i32, %c0_i32_0 : i32, i32
  }
  func.func @transform_6(%arg0: i32) -> (i32, i32) {
    %c0_i32 = arith.constant 0 : i32
    %c0_i32_0 = arith.constant 0 : i32
    %c0_i32_1 = arith.constant 0 : i32
    return %c0_i32, %c0_i32_0 : i32, i32
  }
  func.func @transform_7(%arg0: i32) -> (i32, i32) {
    %c0_i32 = arith.constant 0 : i32
    %c0_i32_0 = arith.constant 0 : i32
    %c0_i32_1 = arith.constant 0 : i32
    return %c0_i32, %c0_i32_0 : i32, i32
  }
  func.func @transform_8(%arg0: i32) -> (i32, i32) {
    %c0_i32 = arith.constant 0 : i32
    %c0_i32_0 = arith.constant 0 : i32
    %c0_i32_1 = arith.constant 0 : i32
    return %c0_i32, %c0_i32_0 : i32, i32
  }
  func.func @transform_9(%arg0: i32) -> (i32, i32) {
    %c0_i32 = arith.constant 0 : i32
    %c0_i32_0 = arith.constant 0 : i32
    return %arg0, %c0_i32 : i32, i32
  }
}

</mosaic_0001>

<llo_original>
// kernel: tpu_custom_call.1
$region0: #{tpu_custom_call.1}
  #allocation0 [shape = 'u32[]', space=smem, size = 0x4, offset = 0x4, fixed_abs, tag = 'smem constant byte address 0x4 - core index']
  #allocation1 [shape = 'u32[144,128]{1,0:T(1,128)}', space=vmem, size = 0x12000, scoped, tag = 'internal scratch']
  #allocation2 [shape = 'f32[1,1]{1,0:T(1,128)S(1)}', space=vmem, size = 0x200, scoped, tag = 'scoped memory for tpu_custom_call.1']
  %s0 = inlined_call_operand.vmem [shape: f32[16,1], index: 0, kind: input, shape index: {}]
  %s1 = inlined_call_operand.vmem [shape: f32[16,128], index: 1, kind: input, shape index: {}]
  %s2 = inlined_call_operand.hbm [shape: f32[16,128], index: 2, kind: input, shape index: {}]
  %s3 = inlined_call_operand.hbm [shape: f32[128,256], index: 3, kind: input, shape index: {}]
  %s4 = inlined_call_operand.hbm [shape: f32[128,256], index: 4, kind: input, shape index: {}]
  %s5 = inlined_call_operand.vmem [shape: f32[1,128], index: 5, kind: input, shape index: {}]
  %s6 = inlined_call_operand.vmem [shape: f32[1,128], index: 6, kind: input, shape index: {}]
  %s7 = inlined_call_operand.<no memory space> [shape: f32[1,1], index: 7, kind: input, shape index: {}]
  %s8 = inlined_call_operand.vmem [shape: f32[1,128], index: 8, kind: input, shape index: {}]
  %s9 = inlined_call_operand.hbm [shape: f32[16,128], index: 9, kind: output, shape index: {}]
  %s10 = sld [smem:[#allocation0]]
  $region81: #{tpu_custom_call.1} parent=0
    _
  %s12 = ssub.s32 1, %s10
  %s13 = scalar_select 0, %s12, %s10
  %v14 = vstv %s7
  %15 = vst [vmem:[#allocation2] sm:$0x1] %v14
  $region1: #{tpu_custom_call.1} parent=0
    #allocation3 [shape = 'u8[8192]{0}', space=vmem, size = 0x2000, scoped, tag = 'input window, operand 2']
    #allocation4 [shape = 's32[2]{0}', space=sflag, size = 0x8, scoped, tag = 'scoped memory for tpu_custom_call.1']
    #allocation5 [shape = 's32[2]{0}', space=sflag, size = 0x8, scoped, tag = 'scoped memory for tpu_custom_call.1']
    #allocation6 [shape = 'u8[131072]{0}', space=vmem, size = 0x20000, scoped, tag = 'input window, operand 3, single buffered']
    #allocation7 [shape = 's32[1]{0}', space=sflag, size = 0x4, scoped, tag = 'scoped memory for tpu_custom_call.1']
    #allocation8 [shape = 'u8[131072]{0}', space=vmem, size = 0x20000, scoped, tag = 'input window, operand 4, single buffered']
    #allocation9 [shape = 'u8[8192]{0}', space=vmem, size = 0x2000, scoped, tag = 'output window, operand 0']
    %16 = vsyncpa [#allocation4], 0
    %s17 = scalar_lea.sflag [#allocation4], 1
    %18 = vsyncpa %s17, 0
    %19 = vsyncpa [#allocation7], 0
    %20 = vsyncpa [#allocation5], 0
    %s21 = scalar_lea.sflag [#allocation5], 1
    %22 = vsyncpa %s21, 0
    loop: start=0, step=1, limit=4
    $region2: #{tpu_custom_call.1} parent=1 // loop_pre_header
      _
    $region3: #{tpu_custom_call.1} parent=1 // loop_header
      %s24 = sphi 0, %s28
      %p25 = scmp.ge.s32.totalorder %s24, 4
      %s34 = sphi 0, %s36
      %s37 = sphi 0, %s34
      %s38 = sphi 0, %s37
      %s54 = sphi 0, %s38
      %s60 = sphi 0, %s62
      %s63 = sphi 0, %s60
      %s64 = sphi 0, %s63
      %s80 = sphi 0, %s64
      %s86 = sphi 0, %s88
      %s89 = sphi 0, %s86
      %s90 = sphi 0, %s89
      %s106 = sphi 0, %s90
      %s110 = sphi 0, %s110
      %s112 = sphi 0, %s110
      %s113 = sphi 0, %s112
      %s127 = sphi 0, %s113
      %s131 = sphi 0, %s131
      %s133 = sphi 0, %s131
      %s134 = sphi 0, %s133
      %s148 = sphi 0, %s134
      %s152 = sphi 0, %s152
      %s154 = sphi 0, %s152
      %s155 = sphi 0, %s154
      %s169 = sphi 0, %s155
      %s173 = sphi 0, %s173
      %s175 = sphi 0, %s173
      %s176 = sphi 0, %s175
      %s190 = sphi 0, %s176
      %s194 = sphi 0, %s194
      %s196 = sphi 0, %s194
      %s197 = sphi 0, %s196
      %s211 = sphi 0, %s197
      %s215 = sphi 0, %s215
      %s217 = sphi 0, %s215
      %s218 = sphi 0, %s217
      %s232 = sphi 0, %s218
      %s238 = sphi 0, %s240
      %s241 = sphi 0, %s238
      %s242 = sphi 0, %s241
      %s258 = sphi 0, %s242
    $region4: #{tpu_custom_call.1} parent=1 // loop_header_branch
      %27 = sbr.rel (%p25) target = $region8
    $region5: #{tpu_custom_call.1} parent=1 // loop_body
      %s29 = ssub.s32 %s24, 1
      %s30 = ssub.s32 %s24, 2
      %s31 = sadd.s32 %s24, 1
      %s32 = ssub.s32 %s24, %s31
      %p33 = scmp.eq.s32.totalorder %s32, 0
      %s35 = sadd.s32 %s34, 1
      %s36 = scalar_select %p33, %s34, %s35
      %p39 = pneg %p33
      %p40 = scmp.eq.s32.totalorder %s24, 1
      %p41 = por %p39, %p40
      %p42 = scmp.ne.s32.totalorder %s34, %s37
      %p43 = scmp.eq.s32.totalorder %s24, 0
      %p44 = por %p42, %p43
      %p45 = scmp.ne.s32.totalorder %s34, %s37
      %p46 = scmp.eq.s32.totalorder %s29, 1
      %p47 = por %p45, %p46
      %p48 = scmp.ne.s32.totalorder %s37, %s38
      %p49 = scmp.eq.s32.totalorder %s29, 0
      %p50 = por %p48, %p49
      %p51 = scmp.ne.s32.totalorder %s37, %s38
      %p52 = scmp.eq.s32.totalorder %s30, 1
      %p53 = por %p51, %p52
      %p55 = scmp.ne.s32.totalorder %s38, %s54
      %p56 = scmp.eq.s32.totalorder %s30, 0
      %p57 = por %p55, %p56
      %s58 = ssub.s32 %s24, %s31
      %p59 = scmp.eq.s32.totalorder %s58, 0
      %s61 = sadd.s32 %s60, 1
      %s62 = scalar_select %p59, %s60, %s61
      %p65 = pneg %p59
      %p66 = scmp.eq.s32.totalorder %s24, 1
      %p67 = por %p65, %p66
      %p68 = scmp.ne.s32.totalorder %s60, %s63
      %p69 = scmp.eq.s32.totalorder %s24, 0
      %p70 = por %p68, %p69
      %p71 = scmp.ne.s32.totalorder %s60, %s63
      %p72 = scmp.eq.s32.totalorder %s29, 1
      %p73 = por %p71, %p72
      %p74 = scmp.ne.s32.totalorder %s63, %s64
      %p75 = scmp.eq.s32.totalorder %s29, 0
      %p76 = por %p74, %p75
      %p77 = scmp.ne.s32.totalorder %s63, %s64
      %p78 = scmp.eq.s32.totalorder %s30, 1
      %p79 = por %p77, %p78
      %p81 = scmp.ne.s32.totalorder %s64, %s80
      %p82 = scmp.eq.s32.totalorder %s30, 0
      %p83 = por %p81, %p82
      %s84 = ssub.s32 %s24, %s31
      %p85 = scmp.eq.s32.totalorder %s84, 0
      %s87 = sadd.s32 %s86, 1
      %s88 = scalar_select %p85, %s86, %s87
      %p91 = pneg %p85
      %p92 = scmp.eq.s32.totalorder %s24, 1
      %p93 = por %p91, %p92
      %p94 = scmp.ne.s32.totalorder %s86, %s89
      %p95 = scmp.eq.s32.totalorder %s24, 0
      %p96 = por %p94, %p95
      %p97 = scmp.ne.s32.totalorder %s86, %s89
      %p98 = scmp.eq.s32.totalorder %s29, 1
      %p99 = por %p97, %p98
      %p100 = scmp.ne.s32.totalorder %s89, %s90
      %p101 = scmp.eq.s32.totalorder %s29, 0
      %p102 = por %p100, %p101
      %p103 = scmp.ne.s32.totalorder %s89, %s90
      %p104 = scmp.eq.s32.totalorder %s30, 1
      %p105 = por %p103, %p104
      %p107 = scmp.ne.s32.totalorder %s90, %s106
      %p108 = scmp.eq.s32.totalorder %s30, 0
      %p109 = por %p107, %p108
      %s111 = sadd.s32 %s110, 1
      %p114 = scmp.eq.s32.totalorder %s24, 1
      %p115 = scmp.ne.s32.totalorder %s110, %s112
      %p116 = scmp.eq.s32.totalorder %s24, 0
      %p117 = por %p115, %p116
      %p118 = scmp.ne.s32.totalorder %s110, %s112
      %p119 = scmp.eq.s32.totalorder %s29, 1
      %p120 = por %p118, %p119
      %p121 = scmp.ne.s32.totalorder %s112, %s113
      %p122 = scmp.eq.s32.totalorder %s29, 0
      %p123 = por %p121, %p122
      %p124 = scmp.ne.s32.totalorder %s112, %s113
      %p125 = scmp.eq.s32.totalorder %s30, 1
      %p126 = por %p124, %p125
      %p128 = scmp.ne.s32.totalorder %s113, %s127
      %p129 = scmp.eq.s32.totalorder %s30, 0
      %p130 = por %p128, %p129
      %s132 = sadd.s32 %s131, 1
      %p135 = scmp.eq.s32.totalorder %s24, 1
      %p136 = scmp.ne.s32.totalorder %s131, %s133
      %p137 = scmp.eq.s32.totalorder %s24, 0
      %p138 = por %p136, %p137
      %p139 = scmp.ne.s32.totalorder %s131, %s133
      %p140 = scmp.eq.s32.totalorder %s29, 1
      %p141 = por %p139, %p140
      %p142 = scmp.ne.s32.totalorder %s133, %s134
      %p143 = scmp.eq.s32.totalorder %s29, 0
      %p144 = por %p142, %p143
      %p145 = scmp.ne.s32.totalorder %s133, %s134
      %p146 = scmp.eq.s32.totalorder %s30, 1
      %p147 = por %p145, %p146
      %p149 = scmp.ne.s32.totalorder %s134, %s148
      %p150 = scmp.eq.s32.totalorder %s30, 0
      %p151 = por %p149, %p150
      %s153 = sadd.s32 %s152, 1
      %p156 = scmp.eq.s32.totalorder %s24, 1
      %p157 = scmp.ne.s32.totalorder %s152, %s154
      %p158 = scmp.eq.s32.totalorder %s24, 0
      %p159 = por %p157, %p158
      %p160 = scmp.ne.s32.totalorder %s152, %s154
      %p161 = scmp.eq.s32.totalorder %s29, 1
      %p162 = por %p160, %p161
      %p163 = scmp.ne.s32.totalorder %s154, %s155
      %p164 = scmp.eq.s32.totalorder %s29, 0
      %p165 = por %p163, %p164
      %p166 = scmp.ne.s32.totalorder %s154, %s155
      %p167 = scmp.eq.s32.totalorder %s30, 1
      %p168 = por %p166, %p167
      %p170 = scmp.ne.s32.totalorder %s155, %s169
      %p171 = scmp.eq.s32.totalorder %s30, 0
      %p172 = por %p170, %p171
      %s174 = sadd.s32 %s173, 1
      %p177 = scmp.eq.s32.totalorder %s24, 1
      %p178 = scmp.ne.s32.totalorder %s173, %s175
      %p179 = scmp.eq.s32.totalorder %s24, 0
      %p180 = por %p178, %p179
      %p181 = scmp.ne.s32.totalorder %s173, %s175
      %p182 = scmp.eq.s32.totalorder %s29, 1
      %p183 = por %p181, %p182
      %p184 = scmp.ne.s32.totalorder %s175, %s176
      %p185 = scmp.eq.s32.totalorder %s29, 0
      %p186 = por %p184, %p185
      %p187 = scmp.ne.s32.totalorder %s175, %s176
      %p188 = scmp.eq.s32.totalorder %s30, 1
      %p189 = por %p187, %p188
      %p191 = scmp.ne.s32.totalorder %s176, %s190
      %p192 = scmp.eq.s32.totalorder %s30, 0
      %p193 = por %p191, %p192
      %s195 = sadd.s32 %s194, 1
      %p198 = scmp.eq.s32.totalorder %s24, 1
      %p199 = scmp.ne.s32.totalorder %s194, %s196
      %p200 = scmp.eq.s32.totalorder %s24, 0
      %p201 = por %p199, %p200
      %p202 = scmp.ne.s32.totalorder %s194, %s196
      %p203 = scmp.eq.s32.totalorder %s29, 1
      %p204 = por %p202, %p203
      %p205 = scmp.ne.s32.totalorder %s196, %s197
      %p206 = scmp.eq.s32.totalorder %s29, 0
      %p207 = por %p205, %p206
      %p208 = scmp.ne.s32.totalorder %s196, %s197
      %p209 = scmp.eq.s32.totalorder %s30, 1
      %p210 = por %p208, %p209
      %p212 = scmp.ne.s32.totalorder %s197, %s211
      %p213 = scmp.eq.s32.totalorder %s30, 0
      %p214 = por %p212, %p213
      %s216 = sadd.s32 %s215, 1
      %p219 = scmp.eq.s32.totalorder %s24, 1
      %p220 = scmp.ne.s32.totalorder %s215, %s217
      %p221 = scmp.eq.s32.totalorder %s24, 0
      %p222 = por %p220, %p221
      %p223 = scmp.ne.s32.totalorder %s215, %s217
      %p224 = scmp.eq.s32.totalorder %s29, 1
      %p225 = por %p223, %p224
      %p226 = scmp.ne.s32.totalorder %s217, %s218
      %p227 = scmp.eq.s32.totalorder %s29, 0
      %p228 = por %p226, %p227
      %p229 = scmp.ne.s32.totalorder %s217, %s218
      %p230 = scmp.eq.s32.totalorder %s30, 1
      %p231 = por %p229, %p230
      %p233 = scmp.ne.s32.totalorder %s218, %s232
      %p234 = scmp.eq.s32.totalorder %s30, 0
      %p235 = por %p233, %p234
      %s236 = ssub.s32 %s24, %s31
      %p237 = scmp.eq.s32.totalorder %s236, 0
      %s239 = sadd.s32 %s238, 1
      %s240 = scalar_select %p237, %s238, %s239
      %p243 = pneg %p237
      %p244 = scmp.eq.s32.totalorder %s24, 1
      %p245 = por %p243, %p244
      %p246 = scmp.ne.s32.totalorder %s238, %s241
      %p247 = scmp.eq.s32.totalorder %s24, 0
      %p248 = por %p246, %p247
      %p249 = scmp.ne.s32.totalorder %s238, %s241
      %p250 = scmp.eq.s32.totalorder %s29, 1
      %p251 = por %p249, %p250
      %p252 = scmp.ne.s32.totalorder %s241, %s242
      %p253 = scmp.eq.s32.totalorder %s29, 0
      %p254 = por %p252, %p253
      %p255 = scmp.ne.s32.totalorder %s241, %s242
      %p256 = scmp.eq.s32.totalorder %s30, 1
      %p257 = por %p255, %p256
      %p259 = scmp.ne.s32.totalorder %s242, %s258
      %p260 = scmp.eq.s32.totalorder %s30, 0
      %p261 = por %p259, %p260
      %p262 = scmp.le.s32.totalorder 1, %s24
      %p263 = scmp.lt.s32.totalorder %s24, 3
      %p264 = pnand %p262, %p263
      %p265 = pneg %p264
      // Predicated region
      $region9: #{tpu_custom_call.1} parent=5 // pred_check
        _
      $region10: #{tpu_custom_call.1} parent=5 // pred_check_branch
        %267 = sbr.rel (%p264) target = $region12
      $region11: #{tpu_custom_call.1} parent=5 // pred_region
        %s268 = ssub.s32 %s24, 1
        // Predicated region
        $region13: #{tpu_custom_call.1} parent=11 // pred_check
          %p269 = pneg %p123
        $region14: #{tpu_custom_call.1} parent=11 // pred_check_branch
          %271 = sbr.rel (%p269) target = $region16
        $region15: #{tpu_custom_call.1} parent=11 // pred_region
          %s273 = ssub.s32 4096, 4096
          %274 = vsyncadd [#allocation7], %s273
          %s275 = sshll.u32 [#allocation6], 4
          %s276 = int_to_ptr.vmem [resolvable:$true] %s275
          %281 = dma.hbm_to_vmem [thread:$0]  %s3, 4096, %s276, [#allocation7], 256, 256, 16
        $region16: #{tpu_custom_call.1} parent=11 // pred_fallthru
          _
        // Predicated region
        $region17: #{tpu_custom_call.1} parent=11 // pred_check
          %p282 = pneg %p144
        $region18: #{tpu_custom_call.1} parent=11 // pred_check_branch
          %284 = sbr.rel (%p282) target = $region20
        $region19: #{tpu_custom_call.1} parent=11 // pred_region
          %s286 = ssub.s32 4096, 4096
          %287 = vsyncadd [#allocation7], %s286
          %s288 = sshll.u32 [#allocation8], 4
          %s289 = int_to_ptr.vmem [resolvable:$true] %s288
          %294 = dma.hbm_to_vmem [thread:$0]  %s4, 4096, %s289, [#allocation7], 256, 256, 16
        $region20: #{tpu_custom_call.1} parent=11 // pred_fallthru
          _
        // Predicated region
        $region21: #{tpu_custom_call.1} parent=11 // pred_check
          %p295 = pneg %p165
        $region22: #{tpu_custom_call.1} parent=11 // pred_check_branch
          %297 = sbr.rel (%p295) target = $region24
        $region23: #{tpu_custom_call.1} parent=11 // pred_region
          _
        $region24: #{tpu_custom_call.1} parent=11 // pred_fallthru
          _
        // Predicated region
        $region25: #{tpu_custom_call.1} parent=11 // pred_check
          %p298 = pneg %p186
        $region26: #{tpu_custom_call.1} parent=11 // pred_check_branch
          %300 = sbr.rel (%p298) target = $region28
        $region27: #{tpu_custom_call.1} parent=11 // pred_region
          _
        $region28: #{tpu_custom_call.1} parent=11 // pred_fallthru
          _
        // Predicated region
        $region29: #{tpu_custom_call.1} parent=11 // pred_check
          %p301 = pneg %p207
        $region30: #{tpu_custom_call.1} parent=11 // pred_check_branch
          %303 = sbr.rel (%p301) target = $region32
        $region31: #{tpu_custom_call.1} parent=11 // pred_region
          _
        $region32: #{tpu_custom_call.1} parent=11 // pred_fallthru
          _
        // Predicated region
        $region33: #{tpu_custom_call.1} parent=11 // pred_check
          %p304 = pneg %p228
        $region34: #{tpu_custom_call.1} parent=11 // pred_check_branch
          %306 = sbr.rel (%p304) target = $region36
        $region35: #{tpu_custom_call.1} parent=11 // pred_region
          _
        $region36: #{tpu_custom_call.1} parent=11 // pred_fallthru
          _
      $region12: #{tpu_custom_call.1} parent=5 // pred_fallthru
        _
      %p307 = scmp.lt.s32.totalorder %s24, 2
      // Predicated region
      $region37: #{tpu_custom_call.1} parent=5 // pred_check
        %p308 = pneg %p307
      $region38: #{tpu_custom_call.1} parent=5 // pred_check_branch
        %310 = sbr.rel (%p308) target = $region40
      $region39: #{tpu_custom_call.1} parent=5 // pred_region
        // Predicated region
        $region41: #{tpu_custom_call.1} parent=39 // pred_check
          %p311 = pneg %p44
        $region42: #{tpu_custom_call.1} parent=39 // pred_check_branch
          %313 = sbr.rel (%p311) target = $region44
        $region43: #{tpu_custom_call.1} parent=39 // pred_region
          %p314 = scmp.lt.s32.totalorder %s24, 1
          %s315 = scalar_select %p314, %s24, 1
          %s316 = smul.addr %s315, 8
          %s317 = scalar_lea.vmem %s0, %s316
        $region44: #{tpu_custom_call.1} parent=39 // pred_fallthru
          _
        // Predicated region
        $region45: #{tpu_custom_call.1} parent=39 // pred_check
          %p318 = pneg %p70
        $region46: #{tpu_custom_call.1} parent=39 // pred_check_branch
          %320 = sbr.rel (%p318) target = $region48
        $region47: #{tpu_custom_call.1} parent=39 // pred_region
          %p321 = scmp.lt.s32.totalorder %s24, 1
          %s322 = scalar_select %p321, %s24, 1
          %s323 = smul.addr %s322, 8
          %s324 = scalar_lea.vmem %s1, %s323
        $region48: #{tpu_custom_call.1} parent=39 // pred_fallthru
          _
        // Predicated region
        $region49: #{tpu_custom_call.1} parent=39 // pred_check
          %p325 = pneg %p96
        $region50: #{tpu_custom_call.1} parent=39 // pred_check_branch
          %327 = sbr.rel (%p325) target = $region52
        $region51: #{tpu_custom_call.1} parent=39 // pred_region
          %s328 = sand.u32 %s86, 1
          %s329 = scalar_lea.sflag [#allocation4], %s328
          %s330 = sand.u32 %s86, 1
          %s331 = smul.addr %s330, 8
          %s332 = scalar_lea.vmem [#allocation3], %s331
          %s334 = ssub.s32 128, 128
          %335 = vsyncadd %s329, %s334
          %s336 = smul.addr %s24, 128
          %s337 = scalar_lea.hbm %s2, %s336
          %s339 = sshll.u32 %s332, 4
          %s340 = int_to_ptr.vmem [resolvable:$true] %s339
          %342 = dma.hbm_to_vmem [thread:$0]  %s337, 128, %s340, %s329
        $region52: #{tpu_custom_call.1} parent=39 // pred_fallthru
          _
      $region40: #{tpu_custom_call.1} parent=5 // pred_fallthru
        _
      %p343 = scmp.le.s32.totalorder 1, %s24
      %p344 = scmp.lt.s32.totalorder %s24, 3
      %p345 = pnand %p343, %p344
      %p346 = pneg %p345
      // Predicated region
      $region53: #{tpu_custom_call.1} parent=5 // pred_check
        _
      $region54: #{tpu_custom_call.1} parent=5 // pred_check_branch
        %348 = sbr.rel (%p345) target = $region56
      $region55: #{tpu_custom_call.1} parent=5 // pred_region
        %s349 = ssub.s32 %s24, 1
        %s350 = sand.u32 %s89, 1
        %s351 = scalar_lea.sflag [#allocation4], %s350
        %s352 = sand.u32 %s89, 1
        %s353 = smul.addr %s352, 8
        %s354 = scalar_lea.vmem [#allocation3], %s353
        // Predicated region
        $region57: #{tpu_custom_call.1} parent=55 // pred_check
          %p355 = pneg %p102
        $region58: #{tpu_custom_call.1} parent=55 // pred_check_branch
          %357 = sbr.rel (%p355) target = $region60
        $region59: #{tpu_custom_call.1} parent=55 // pred_region
          %358 = dma.done %s351, 128
        $region60: #{tpu_custom_call.1} parent=55 // pred_fallthru
          _
        // Predicated region
        $region61: #{tpu_custom_call.1} parent=55 // pred_check
          %p359 = pneg %p123
        $region62: #{tpu_custom_call.1} parent=55 // pred_check_branch
          %361 = sbr.rel (%p359) target = $region64
        $region63: #{tpu_custom_call.1} parent=55 // pred_region
          %362 = dma.done [#allocation7], 4096
        $region64: #{tpu_custom_call.1} parent=55 // pred_fallthru
          _
        // Predicated region
        $region65: #{tpu_custom_call.1} parent=55 // pred_check
          %p363 = pneg %p144
        $region66: #{tpu_custom_call.1} parent=55 // pred_check_branch
          %365 = sbr.rel (%p363) target = $region68
        $region67: #{tpu_custom_call.1} parent=55 // pred_region
          %366 = dma.done [#allocation7], 4096
        $region68: #{tpu_custom_call.1} parent=55 // pred_fallthru
          _
        %p367 = scmp.lt.s32.totalorder %s29, 1
        %s368 = scalar_select %p367, %s29, 1
        %s369 = smul.addr %s368, 8
        %s370 = scalar_lea.vmem %s0, %s369
        %p371 = pneg %p50
        %p372 = pneg %p47
        %p373 = scmp.lt.s32.totalorder %s29, 1
        %s374 = scalar_select %p373, %s29, 1
        %s375 = smul.addr %s374, 8
        %s376 = scalar_lea.vmem %s1, %s375
        %p377 = pneg %p76
        %p378 = pneg %p73
        %s379 = sand.u32 %s89, 1
        %s380 = scalar_lea.sflag [#allocation4], %s379
        %s381 = sand.u32 %s89, 1
        %s382 = smul.addr %s381, 8
        %s383 = scalar_lea.vmem [#allocation3], %s382
        %p384 = pneg %p102
        %p385 = pneg %p99
        %p386 = pneg %p123
        %p387 = pneg %p120
        %p388 = pneg %p144
        %p389 = pneg %p141
        %p390 = pneg %p165
        %p391 = pneg %p162
        %p392 = pneg %p186
        %p393 = pneg %p183
        %p394 = pneg %p207
        %p395 = pneg %p204
        %p396 = pneg %p228
        %p397 = pneg %p225
        %p398 = pneg %p254
        %p399 = pneg %p251
        %s400 = sand.u32 %s241, 1
        %s401 = scalar_lea.sflag [#allocation5], %s400
        %s402 = sand.u32 %s241, 1
        %s403 = smul.addr %s402, 8
        %s404 = scalar_lea.vmem [#allocation9], %s403
        %p405 = scmp.lt.s32.totalorder %s29, 1
        %s406 = scalar_select %p405, %s29, 1
        %s407 = smul.addr %s406, 8
        %s408 = scalar_lea.vmem %s0, %s407
        %p409 = scmp.lt.s32.totalorder %s29, 1
        %s410 = scalar_select %p409, %s29, 1
        %s411 = smul.addr %s410, 8
        %s412 = scalar_lea.vmem %s1, %s411
        %v413 = vld [vmem:[%s354] sm:$0xff]
        %v414 = vld [vmem:[%s408] sm:$0xff]
        %vm415 = vcmp.gt.f32.partialorder %v414, 0.0
        %v416 = vld [vmem:[%s412] sm:$0xff]
        %v417 = vsel %vm415, 1, 0
        %418 = vset.pattern.permute.xlu0 0
        %419 = vperm.xlu0 %418, %v417
        %v420 = vpop.permute.xlu0 %419
        %vm421 = vcmp.eq.s32.totalorder %v420, 1
        %v422 = vsel %vm421, %v416, %v413
        %v423 = vld [vmem:[#allocation6] sm:$0xff]
        %v424 = vld [vmem:[#allocation6 + $0x8] sm:$0xff]
        %v425 = vld [vmem:[#allocation6 + $0x10] sm:$0xff]
        %v426 = vld [vmem:[#allocation6 + $0x18] sm:$0xff]
        %v427 = vld [vmem:[#allocation6 + $0x20] sm:$0xff]
        %v428 = vld [vmem:[#allocation6 + $0x28] sm:$0xff]
        %v429 = vld [vmem:[#allocation6 + $0x30] sm:$0xff]
        %v430 = vld [vmem:[#allocation6 + $0x38] sm:$0xff]
        %v431 = vld [vmem:[#allocation6 + $0x40] sm:$0xff]
        %v432 = vld [vmem:[#allocation6 + $0x48] sm:$0xff]
        %v433 = vld [vmem:[#allocation6 + $0x50] sm:$0xff]
        %v434 = vld [vmem:[#allocation6 + $0x58] sm:$0xff]
        %v435 = vld [vmem:[#allocation6 + $0x60] sm:$0xff]
        %v436 = vld [vmem:[#allocation6 + $0x68] sm:$0xff]
        %v437 = vld [vmem:[#allocation6 + $0x70] sm:$0xff]
        %v438 = vld [vmem:[#allocation6 + $0x78] sm:$0xff]
        %v439 = vld [vmem:[#allocation6 + $0x80] sm:$0xff]
        %v440 = vld [vmem:[#allocation6 + $0x88] sm:$0xff]
        %v441 = vld [vmem:[#allocation6 + $0x90] sm:$0xff]
        %v442 = vld [vmem:[#allocation6 + $0x98] sm:$0xff]
        %v443 = vld [vmem:[#allocation6 + $0xa0] sm:$0xff]
        %v444 = vld [vmem:[#allocation6 + $0xa8] sm:$0xff]
        %v445 = vld [vmem:[#allocation6 + $0xb0] sm:$0xff]
        %v446 = vld [vmem:[#allocation6 + $0xb8] sm:$0xff]
        %v447 = vld [vmem:[#allocation6 + $0xc0] sm:$0xff]
        %v448 = vld [vmem:[#allocation6 + $0xc8] sm:$0xff]
        %v449 = vld [vmem:[#allocation6 + $0xd0] sm:$0xff]
        %v450 = vld [vmem:[#allocation6 + $0xd8] sm:$0xff]
        %v451 = vld [vmem:[#allocation6 + $0xe0] sm:$0xff]
        %v452 = vld [vmem:[#allocation6 + $0xe8] sm:$0xff]
        %v453 = vld [vmem:[#allocation6 + $0xf0] sm:$0xff]
        %v454 = vld [vmem:[#allocation6 + $0xf8] sm:$0xff]
        %455 = vmatprep.subr.mxu0 %v424
        %456 = vmatpush1.msra.mxu0 %v423
        %457 = vmatprep.subr.mxu0 %v426
        %458 = vmatpush1.msra.mxu0 %v425
        %459 = vmatprep.subr.mxu0 %v428
        %460 = vmatpush1.msra.mxu0 %v427
        %461 = vmatprep.subr.mxu0 %v430
        %462 = vmatpush1.msra.mxu0 %v429
        %463 = vmatprep.subr.mxu0 %v432
        %464 = vmatpush1.msra.mxu0 %v431
        %465 = vmatprep.subr.mxu0 %v434
        %466 = vmatpush1.msra.mxu0 %v433
        %467 = vmatprep.subr.mxu0 %v436
        %468 = vmatpush1.msra.mxu0 %v435
        %469 = vmatprep.subr.mxu0 %v438
        %470 = vmatpush1.msra.mxu0 %v437
        %471 = vmatprep.subr.mxu0 %v440
        %472 = vmatpush1.msra.mxu0 %v439
        %473 = vmatprep.subr.mxu0 %v442
        %474 = vmatpush1.msra.mxu0 %v441
        %475 = vmatprep.subr.mxu0 %v444
        %476 = vmatpush1.msra.mxu0 %v443
        %477 = vmatprep.subr.mxu0 %v446
        %478 = vmatpush1.msra.mxu0 %v445
        %479 = vmatprep.subr.mxu0 %v448
        %480 = vmatpush1.msra.mxu0 %v447
        %481 = vmatprep.subr.mxu0 %v450
        %482 = vmatpush1.msra.mxu0 %v449
        %483 = vmatprep.subr.mxu0 %v452
        %484 = vmatpush1.msra.mxu0 %v451
        %485 = vmatprep.subr.mxu0 %v454
        %486 = vmatpush1.msra.mxu0 %v453
        %487 = vmatprep.subr.mxu0 0.0
        %488 = vmatpush1.msra.mxu0 0.0
        %489 = vmatprep.subr.mxu0 0.0
        %490 = vmatpush1.msra.mxu0 0.0
        %491 = vmatprep.subr.mxu0 0.0
        %492 = vmatpush1.msra.mxu0 0.0
        %493 = vmatprep.subr.mxu0 0.0
        %494 = vmatpush1.msra.mxu0 0.0
        %495 = vmatprep.subr.mxu0 0.0
        %496 = vmatpush1.msra.mxu0 0.0
        %497 = vmatprep.subr.mxu0 0.0
        %498 = vmatpush1.msra.mxu0 0.0
        %499 = vmatprep.subr.mxu0 0.0
        %500 = vmatpush1.msra.mxu0 0.0
        %501 = vmatprep.subr.mxu0 0.0
        %502 = vmatpush1.msra.mxu0 0.0
        %503 = vmatprep.subr.mxu0 0.0
        %504 = vmatpush1.msra.mxu0 0.0
        %505 = vmatprep.subr.mxu0 0.0
        %506 = vmatpush1.msra.mxu0 0.0
        %507 = vmatprep.subr.mxu0 0.0
        %508 = vmatpush1.msra.mxu0 0.0
        %509 = vmatprep.subr.mxu0 0.0
        %510 = vmatpush1.msra.mxu0 0.0
        %511 = vmatprep.subr.mxu0 0.0
        %512 = vmatpush1.msra.mxu0 0.0
        %513 = vmatprep.subr.mxu0 0.0
        %514 = vmatpush1.msra.mxu0 0.0
        %515 = vmatprep.subr.mxu0 0.0
        %516 = vmatpush1.msra.mxu0 0.0
        %517 = vmatprep.subr.mxu0 0.0
        %518 = vmatpush1.msra.mxu0 0.0
        %519 = vmatprep.mubr.f32.mxu0 0.0
        %520 = vmatmul.mubr.f32.gmra.mrb[0].mxu0 %v422
        %v521 = vpop.f32.mrb[0].mxu0
        %v522 = vadd.f32 0.0, %v521
        %v523 = vpop.f32.mrb[0].mxu0
        %v524 = vadd.f32 0.0, %v523
        %525 = vdwg.mxu0
        %v526 = vld [vmem:[#allocation8] sm:$0xff]
        %v527 = vld [vmem:[#allocation8 + $0x8] sm:$0xff]
        %v528 = vld [vmem:[#allocation8 + $0x10] sm:$0xff]
        %v529 = vld [vmem:[#allocation8 + $0x18] sm:$0xff]
        %v530 = vld [vmem:[#allocation8 + $0x20] sm:$0xff]
        %v531 = vld [vmem:[#allocation8 + $0x28] sm:$0xff]
        %v532 = vld [vmem:[#allocation8 + $0x30] sm:$0xff]
        %v533 = vld [vmem:[#allocation8 + $0x38] sm:$0xff]
        %v534 = vld [vmem:[#allocation8 + $0x40] sm:$0xff]
        %v535 = vld [vmem:[#allocation8 + $0x48] sm:$0xff]
        %v536 = vld [vmem:[#allocation8 + $0x50] sm:$0xff]
        %v537 = vld [vmem:[#allocation8 + $0x58] sm:$0xff]
        %v538 = vld [vmem:[#allocation8 + $0x60] sm:$0xff]
        %v539 = vld [vmem:[#allocation8 + $0x68] sm:$0xff]
        %v540 = vld [vmem:[#allocation8 + $0x70] sm:$0xff]
        %v541 = vld [vmem:[#allocation8 + $0x78] sm:$0xff]
        %v542 = vld [vmem:[#allocation8 + $0x80] sm:$0xff]
        %v543 = vld [vmem:[#allocation8 + $0x88] sm:$0xff]
        %v544 = vld [vmem:[#allocation8 + $0x90] sm:$0xff]
        %v545 = vld [vmem:[#allocation8 + $0x98] sm:$0xff]
        %v546 = vld [vmem:[#allocation8 + $0xa0] sm:$0xff]
        %v547 = vld [vmem:[#allocation8 + $0xa8] sm:$0xff]
        %v548 = vld [vmem:[#allocation8 + $0xb0] sm:$0xff]
        %v549 = vld [vmem:[#allocation8 + $0xb8] sm:$0xff]
        %v550 = vld [vmem:[#allocation8 + $0xc0] sm:$0xff]
        %v551 = vld [vmem:[#allocation8 + $0xc8] sm:$0xff]
        %v552 = vld [vmem:[#allocation8 + $0xd0] sm:$0xff]
        %v553 = vld [vmem:[#allocation8 + $0xd8] sm:$0xff]
        %v554 = vld [vmem:[#allocation8 + $0xe0] sm:$0xff]
        %v555 = vld [vmem:[#allocation8 + $0xe8] sm:$0xff]
        %v556 = vld [vmem:[#allocation8 + $0xf0] sm:$0xff]
        %v557 = vld [vmem:[#allocation8 + $0xf8] sm:$0xff]
        %558 = vmatprep.subr.mxu0 %v527
        %559 = vmatpush1.msra.mxu0 %v526
        %560 = vmatprep.subr.mxu0 %v529
        %561 = vmatpush1.msra.mxu0 %v528
        %562 = vmatprep.subr.mxu0 %v531
        %563 = vmatpush1.msra.mxu0 %v530
        %564 = vmatprep.subr.mxu0 %v533
        %565 = vmatpush1.msra.mxu0 %v532
        %566 = vmatprep.subr.mxu0 %v535
        %567 = vmatpush1.msra.mxu0 %v534
        %568 = vmatprep.subr.mxu0 %v537
        %569 = vmatpush1.msra.mxu0 %v536
        %570 = vmatprep.subr.mxu0 %v539
        %571 = vmatpush1.msra.mxu0 %v538
        %572 = vmatprep.subr.mxu0 %v541
        %573 = vmatpush1.msra.mxu0 %v540
        %574 = vmatprep.subr.mxu0 %v543
        %575 = vmatpush1.msra.mxu0 %v542
        %576 = vmatprep.subr.mxu0 %v545
        %577 = vmatpush1.msra.mxu0 %v544
        %578 = vmatprep.subr.mxu0 %v547
        %579 = vmatpush1.msra.mxu0 %v546
        %580 = vmatprep.subr.mxu0 %v549
        %581 = vmatpush1.msra.mxu0 %v548
        %582 = vmatprep.subr.mxu0 %v551
        %583 = vmatpush1.msra.mxu0 %v550
        %584 = vmatprep.subr.mxu0 %v553
        %585 = vmatpush1.msra.mxu0 %v552
        %586 = vmatprep.subr.mxu0 %v555
        %587 = vmatpush1.msra.mxu0 %v554
        %588 = vmatprep.subr.mxu0 %v557
        %589 = vmatpush1.msra.mxu0 %v556
        %590 = vmatprep.subr.mxu0 0.0
        %591 = vmatpush1.msra.mxu0 0.0
        %592 = vmatprep.subr.mxu0 0.0
        %593 = vmatpush1.msra.mxu0 0.0
        %594 = vmatprep.subr.mxu0 0.0
        %595 = vmatpush1.msra.mxu0 0.0
        %596 = vmatprep.subr.mxu0 0.0
        %597 = vmatpush1.msra.mxu0 0.0
        %598 = vmatprep.subr.mxu0 0.0
        %599 = vmatpush1.msra.mxu0 0.0
        %600 = vmatprep.subr.mxu0 0.0
        %601 = vmatpush1.msra.mxu0 0.0
        %602 = vmatprep.subr.mxu0 0.0
        %603 = vmatpush1.msra.mxu0 0.0
        %604 = vmatprep.subr.mxu0 0.0
        %605 = vmatpush1.msra.mxu0 0.0
        %606 = vmatprep.subr.mxu0 0.0
        %607 = vmatpush1.msra.mxu0 0.0
        %608 = vmatprep.subr.mxu0 0.0
        %609 = vmatpush1.msra.mxu0 0.0
        %610 = vmatprep.subr.mxu0 0.0
        %611 = vmatpush1.msra.mxu0 0.0
        %612 = vmatprep.subr.mxu0 0.0
        %613 = vmatpush1.msra.mxu0 0.0
        %614 = vmatprep.subr.mxu0 0.0
        %615 = vmatpush1.msra.mxu0 0.0
        %616 = vmatprep.subr.mxu0 0.0
        %617 = vmatpush1.msra.mxu0 0.0
        %618 = vmatprep.subr.mxu0 0.0
        %619 = vmatpush1.msra.mxu0 0.0
        %620 = vmatprep.subr.mxu0 0.0
        %621 = vmatpush1.msra.mxu0 0.0
        %622 = vmatprep.mubr.f32.mxu0 0.0
        %623 = vmatmul.mubr.f32.gmra.mrb[0].mxu0 %v413
        %v624 = vpop.f32.mrb[0].mxu0
        %v625 = vadd.f32 0.0, %v624
        %v626 = vpop.f32.mrb[0].mxu0
        %v627 = vadd.f32 0.0, %v626
        %628 = vdwg.mxu0
        %v629 = vadd.f32 %v522, %v625
        %v630 = vld [vmem:[%s5] sm:$0x1]
        %v632 = vlaneseq
        %v633 = vshrl.u32 %v632, 7
        %v634 = vsub.s32 0, %v633
        %v635 = vrot.slane %v630, %v634
        %v637 = vadd.f32 %v629, %v635
        %v638 = vtanh.pop %v637
        %v639 = vld [vmem:[%s6] sm:$0x1]
        %v641 = vlaneseq
        %v642 = vshrl.u32 %v641, 7
        %v643 = vsub.s32 0, %v642
        %v644 = vrot.slane %v639, %v643
        %v646 = vmul.f32 %v638, %v644
        %647 = vadd.xlane.f32.xlu0 %v646
        %v648 = vpop.xlane.xlu0 %647
        %v649 = vld [vmem:[#allocation2] sm:$0x1]
        %v651 = vlaneseq
        %v652 = vshrl.u32 %v651, 7
        %v653 = vsub.s32 0, %v652
        %v654 = vrot.slane %v649, %v653
        %v656 = vadd.f32 %v648, %v654
        %v657 = vxor.u32 %v656, 2147483648
        %v658 = vmul.f32 %v657, 1.442695
        %v659 = vpow.pop %v658
        %v660 = vadd.f32 %v659, 1.0
        %v661 = vrcp.pop %v660
        %v662 = vmul.f32 1.0, %v661
        %v663 = vsub.f32 1.0, %v662
        %v664 = vsub.f32 %v524, %v627
        %666 = vset.pattern.permute.xlu0 0
        %667 = vperm.xlu0 %666, %v662
        %v668 = vpop.permute.xlu0 %667
        %v670 = vmul.f32 %v668, %v664
        %v671 = vadd.f32 %v627, %v670
        %v672 = vld [vmem:[%s8] sm:$0x1]
        %v674 = vlaneseq
        %v675 = vshrl.u32 %v674, 7
        %v676 = vsub.s32 0, %v675
        %v677 = vrot.slane %v672, %v676
        %v679 = vadd.f32 %v671, %v677
        %v680 = vlaneseq
        %v681 = vand.u32 %v680, 127
        %vm682 = vcmp.eq.s32.totalorder %v681, 7
        %v683 = vsel %vm682, 1, 0
        %v684 = vcvt.s32.f32 %v683
        %vm685 = vcmp.eq.s32.totalorder %v681, 8
        %v686 = vsel %vm685, 1, 0
        %v687 = vcvt.s32.f32 %v686
        %v688 = vmul.f32 %v668, %v684
        %v689 = vadd.f32 %v679, %v688
        %691 = vset.pattern.permute.xlu0 0
        %692 = vperm.xlu0 %691, %v663
        %v693 = vpop.permute.xlu0 %692
        %v695 = vmul.f32 %v693, %v687
        %v696 = vadd.f32 %v689, %v695
        %697 = vst [vmem:[%s404] sm:$0xff] %v696
        %s698 = sand.u32 %s241, 1
        %s699 = scalar_lea.sflag [#allocation5], %s698
        %s700 = sand.u32 %s241, 1
        %s701 = smul.addr %s700, 8
        %s702 = scalar_lea.vmem [#allocation9], %s701
        // Predicated region
        $region69: #{tpu_custom_call.1} parent=55 // pred_check
          %p703 = pneg %p251
        $region70: #{tpu_custom_call.1} parent=55 // pred_check_branch
          %705 = sbr.rel (%p703) target = $region72
        $region71: #{tpu_custom_call.1} parent=55 // pred_region
          %s707 = ssub.s32 128, 128
          %708 = vsyncadd %s699, %s707
          %s709 = smul.addr %s29, 128
          %s710 = scalar_lea.hbm %s9, %s709
          %s712 = sshll.u32 %s702, 4
          %s713 = int_to_ptr.vmem [resolvable:$true] %s712
          %715 = dma.vmem_to_hbm [thread:$0]  %s713, 128, %s710, %s699
        $region72: #{tpu_custom_call.1} parent=55 // pred_fallthru
          _
      $region56: #{tpu_custom_call.1} parent=5 // pred_fallthru
        _
      %p716 = scmp.le.s32.totalorder 2, %s24
      // Predicated region
      $region73: #{tpu_custom_call.1} parent=5 // pred_check
        %p717 = pneg %p716
      $region74: #{tpu_custom_call.1} parent=5 // pred_check_branch
        %719 = sbr.rel (%p717) target = $region76
      $region75: #{tpu_custom_call.1} parent=5 // pred_region
        %s720 = ssub.s32 %s24, 2
        // Predicated region
        $region77: #{tpu_custom_call.1} parent=75 // pred_check
          %p721 = pneg %p257
        $region78: #{tpu_custom_call.1} parent=75 // pred_check_branch
          %723 = sbr.rel (%p721) target = $region80
        $region79: #{tpu_custom_call.1} parent=75 // pred_region
          %s724 = sand.u32 %s242, 1
          %s725 = scalar_lea.sflag [#allocation5], %s724
          %s726 = sand.u32 %s242, 1
          %s727 = smul.addr %s726, 8
          %s728 = scalar_lea.vmem [#allocation9], %s727
          %729 = dma.done %s725, 128
        $region80: #{tpu_custom_call.1} parent=75 // pred_fallthru
          _
      $region76: #{tpu_custom_call.1} parent=5 // pred_fallthru
        _
    $region6: #{tpu_custom_call.1} parent=1 // loop_footer
      %s28 = sadd.s32 1, %s24
    $region7: #{tpu_custom_call.1} parent=1 // loop_footer_branch
      %23 = sbr.rel target = $region3
    $region8: #{tpu_custom_call.1} parent=1 // loop_exit
      _
    %730 = vsyncpa [#allocation4], 1
    %s731 = scalar_lea.sflag [#allocation4], 1
    %732 = vsyncpa %s731, 1
    %733 = vsyncpa [#allocation7], 1
    %734 = vsyncpa [#allocation5], 1
    %s735 = scalar_lea.sflag [#allocation5], 1
    %736 = vsyncpa %s735, 1

// kernel: tpu_custom_call.1
$region0: #{tpu_custom_call.1}
  #allocation0 [shape = 'u32[]', space=smem, size = 0x4, offset = 0x4, fixed_abs, tag = 'smem constant byte address 0x4 - core index']
  #allocation1 [shape = 'u32[144,128]{1,0:T(1,128)}', space=vmem, size = 0x12000, scoped, tag = 'internal scratch']
  #allocation2 [shape = 'f32[1,1]{1,0:T(1,128)S(1)}', space=vmem, size = 0x200, scoped, tag = 'scoped memory for tpu_custom_call.1']
  %s0 = inlined_call_operand.vmem [shape: f32[16,1], index: 0, kind: input, shape index: {}]
  %s1 = inlined_call_operand.vmem [shape: f32[16,128], index: 1, kind: input, shape index: {}]
  %s2 = inlined_call_operand.hbm [shape: f32[16,128], index: 2, kind: input, shape index: {}]
  %s3 = inlined_call_operand.hbm [shape: f32[128,256], index: 3, kind: input, shape index: {}]
  %s4 = inlined_call_operand.hbm [shape: f32[128,256], index: 4, kind: input, shape index: {}]
  %s5 = inlined_call_operand.vmem [shape: f32[1,128], index: 5, kind: input, shape index: {}]
  %s6 = inlined_call_operand.vmem [shape: f32[1,128], index: 6, kind: input, shape index: {}]
  %s7 = inlined_call_operand.<no memory space> [shape: f32[1,1], index: 7, kind: input, shape index: {}]
  %s8 = inlined_call_operand.vmem [shape: f32[1,128], index: 8, kind: input, shape index: {}]
  %s9 = inlined_call_operand.hbm [shape: f32[16,128], index: 9, kind: output, shape index: {}]
  %s10 = sld [smem:[#allocation0]]
  $region81: #{tpu_custom_call.1} parent=0
    _
  %s12 = ssub.s32 1, %s10
  %s13 = scalar_select 0, %s12, %s10
  %v14 = vstv %s7
  %15 = vst [vmem:[#allocation2] sm:$0x1] %v14
  $region1: #{tpu_custom_call.1} parent=0
    #allocation3 [shape = 'u8[8192]{0}', space=vmem, size = 0x2000, scoped, tag = 'input window, operand 2']
    #allocation4 [shape = 's32[2]{0}', space=sflag, size = 0x8, scoped, tag = 'scoped memory for tpu_custom_call.1']
    #allocation5 [shape = 's32[2]{0}', space=sflag, size = 0x8, scoped, tag = 'scoped memory for tpu_custom_call.1']
    #allocation6 [shape = 'u8[131072]{0}', space=vmem, size = 0x20000, scoped, tag = 'input window, operand 3, single buffered']
    #allocation7 [shape = 's32[1]{0}', space=sflag, size = 0x4, scoped, tag = 'scoped memory for tpu_custom_call.1']
    #allocation8 [shape = 'u8[131072]{0}', space=vmem, size = 0x20000, scoped, tag = 'input window, operand 4, single buffered']
    #allocation9 [shape = 'u8[8192]{0}', space=vmem, size = 0x2000, scoped, tag = 'output window, operand 0']
    %16 = vsyncpa [#allocation4], 0
    %s17 = scalar_lea.sflag [#allocation4], 1
    %18 = vsyncpa %s17, 0
    %19 = vsyncpa [#allocation7], 0
    %20 = vsyncpa [#allocation5], 0
    %s21 = scalar_lea.sflag [#allocation5], 1
    %22 = vsyncpa %s21, 0
    loop: start=0, step=1, limit=4
    $region2: #{tpu_custom_call.1} parent=1 // loop_pre_header
      _
    $region3: #{tpu_custom_call.1} parent=1 // loop_header
      %s24 = sphi 0, %s28
      %p25 = scmp.ge.s32.totalorder %s24, 4
      %s34 = sphi 0, %s36
      %s37 = sphi 0, %s34
      %s38 = sphi 0, %s37
      %s54 = sphi 0, %s38
      %s60 = sphi 0, %s62
      %s63 = sphi 0, %s60
      %s64 = sphi 0, %s63
      %s80 = sphi 0, %s64
      %s86 = sphi 0, %s88
      %s89 = sphi 0, %s86
      %s90 = sphi 0, %s89
      %s106 = sphi 0, %s90
      %s110 = sphi 0, %s110
      %s112 = sphi 0, %s110
      %s113 = sphi 0, %s112
      %s127 = sphi 0, %s113
      %s131 = sphi 0, %s131
      %s133 = sphi 0, %s131
      %s134 = sphi 0, %s133
      %s148 = sphi 0, %s134
      %s152 = sphi 0, %s152
      %s154 = sphi 0, %s152
      %s155 = sphi 0, %s154
      %s169 = sphi 0, %s155
      %s173 = sphi 0, %s173
      %s175 = sphi 0, %s173
      %s176 = sphi 0, %s175
      %s190 = sphi 0, %s176
      %s194 = sphi 0, %s194
      %s196 = sphi 0, %s194
      %s197 = sphi 0, %s196
      %s211 = sphi 0, %s197
      %s215 = sphi 0, %s215
      %s217 = sphi 0, %s215
      %s218 = sphi 0, %s217
      %s232 = sphi 0, %s218
      %s238 = sphi 0, %s240
      %s241 = sphi 0, %s238
      %s242 = sphi 0, %s241
      %s258 = sphi 0, %s242
    $region4: #{tpu_custom_call.1} parent=1 // loop_header_branch
      %27 = sbr.rel (%p25) target = $region8
    $region5: #{tpu_custom_call.1} parent=1 // loop_body
      %s29 = ssub.s32 %s24, 1
      %s30 = ssub.s32 %s24, 2
      %s31 = sadd.s32 %s24, 1
      %s32 = ssub.s32 %s24, %s31
      %p33 = scmp.eq.s32.totalorder %s32, 0
      %s35 = sadd.s32 %s34, 1
      %s36 = scalar_select %p33, %s34, %s35
      %p39 = pneg %p33
      %p40 = scmp.eq.s32.totalorder %s24, 1
      %p41 = por %p39, %p40
      %p42 = scmp.ne.s32.totalorder %s34, %s37
      %p43 = scmp.eq.s32.totalorder %s24, 0
      %p44 = por %p42, %p43
      %p45 = scmp.ne.s32.totalorder %s34, %s37
      %p46 = scmp.eq.s32.totalorder %s29, 1
      %p47 = por %p45, %p46
      %p48 = scmp.ne.s32.totalorder %s37, %s38
      %p49 = scmp.eq.s32.totalorder %s29, 0
      %p50 = por %p48, %p49
      %p51 = scmp.ne.s32.totalorder %s37, %s38
      %p52 = scmp.eq.s32.totalorder %s30, 1
      %p53 = por %p51, %p52
      %p55 = scmp.ne.s32.totalorder %s38, %s54
      %p56 = scmp.eq.s32.totalorder %s30, 0
      %p57 = por %p55, %p56
      %s58 = ssub.s32 %s24, %s31
      %p59 = scmp.eq.s32.totalorder %s58, 0
      %s61 = sadd.s32 %s60, 1
      %s62 = scalar_select %p59, %s60, %s61
      %p65 = pneg %p59
      %p66 = scmp.eq.s32.totalorder %s24, 1
      %p67 = por %p65, %p66
      %p68 = scmp.ne.s32.totalorder %s60, %s63
      %p69 = scmp.eq.s32.totalorder %s24, 0
      %p70 = por %p68, %p69
      %p71 = scmp.ne.s32.totalorder %s60, %s63
      %p72 = scmp.eq.s32.totalorder %s29, 1
      %p73 = por %p71, %p72
      %p74 = scmp.ne.s32.totalorder %s63, %s64
      %p75 = scmp.eq.s32.totalorder %s29, 0
      %p76 = por %p74, %p75
      %p77 = scmp.ne.s32.totalorder %s63, %s64
      %p78 = scmp.eq.s32.totalorder %s30, 1
      %p79 = por %p77, %p78
      %p81 = scmp.ne.s32.totalorder %s64, %s80
      %p82 = scmp.eq.s32.totalorder %s30, 0
      %p83 = por %p81, %p82
      %s84 = ssub.s32 %s24, %s31
      %p85 = scmp.eq.s32.totalorder %s84, 0
      %s87 = sadd.s32 %s86, 1
      %s88 = scalar_select %p85, %s86, %s87
      %p91 = pneg %p85
      %p92 = scmp.eq.s32.totalorder %s24, 1
      %p93 = por %p91, %p92
      %p94 = scmp.ne.s32.totalorder %s86, %s89
      %p95 = scmp.eq.s32.totalorder %s24, 0
      %p96 = por %p94, %p95
      %p97 = scmp.ne.s32.totalorder %s86, %s89
      %p98 = scmp.eq.s32.totalorder %s29, 1
      %p99 = por %p97, %p98
      %p100 = scmp.ne.s32.totalorder %s89, %s90
      %p101 = scmp.eq.s32.totalorder %s29, 0
      %p102 = por %p100, %p101
      %p103 = scmp.ne.s32.totalorder %s89, %s90
      %p104 = scmp.eq.s32.totalorder %s30, 1
      %p105 = por %p103, %p104
      %p107 = scmp.ne.s32.totalorder %s90, %s106
      %p108 = scmp.eq.s32.totalorder %s30, 0
      %p109 = por %p107, %p108
      %s111 = sadd.s32 %s110, 1
      %p114 = scmp.eq.s32.totalorder %s24, 1
      %p115 = scmp.ne.s32.totalorder %s110, %s112
      %p116 = scmp.eq.s32.totalorder %s24, 0
      %p117 = por %p115, %p116
      %p118 = scmp.ne.s32.totalorder %s110, %s112
      %p119 = scmp.eq.s32.totalorder %s29, 1
      %p120 = por %p118, %p119
      %p121 = scmp.ne.s32.totalorder %s112, %s113
      %p122 = scmp.eq.s32.totalorder %s29, 0
      %p123 = por %p121, %p122
      %p124 = scmp.ne.s32.totalorder %s112, %s113
      %p125 = scmp.eq.s32.totalorder %s30, 1
      %p126 = por %p124, %p125
      %p128 = scmp.ne.s32.totalorder %s113, %s127
      %p129 = scmp.eq.s32.totalorder %s30, 0
      %p130 = por %p128, %p129
      %s132 = sadd.s32 %s131, 1
      %p135 = scmp.eq.s32.totalorder %s24, 1
      %p136 = scmp.ne.s32.totalorder %s131, %s133
      %p137 = scmp.eq.s32.totalorder %s24, 0
      %p138 = por %p136, %p137
      %p139 = scmp.ne.s32.totalorder %s131, %s133
      %p140 = scmp.eq.s32.totalorder %s29, 1
      %p141 = por %p139, %p140
      %p142 = scmp.ne.s32.totalorder %s133, %s134
      %p143 = scmp.eq.s32.totalorder %s29, 0
      %p144 = por %p142, %p143
      %p145 = scmp.ne.s32.totalorder %s133, %s134
      %p146 = scmp.eq.s32.totalorder %s30, 1
      %p147 = por %p145, %p146
      %p149 = scmp.ne.s32.totalorder %s134, %s148
      %p150 = scmp.eq.s32.totalorder %s30, 0
      %p151 = por %p149, %p150
      %s153 = sadd.s32 %s152, 1
      %p156 = scmp.eq.s32.totalorder %s24, 1
      %p157 = scmp.ne.s32.totalorder %s152, %s154
      %p158 = scmp.eq.s32.totalorder %s24, 0
      %p159 = por %p157, %p158
      %p160 = scmp.ne.s32.totalorder %s152, %s154
      %p161 = scmp.eq.s32.totalorder %s29, 1
      %p162 = por %p160, %p161
      %p163 = scmp.ne.s32.totalorder %s154, %s155
      %p164 = scmp.eq.s32.totalorder %s29, 0
      %p165 = por %p163, %p164
      %p166 = scmp.ne.s32.totalorder %s154, %s155
      %p167 = scmp.eq.s32.totalorder %s30, 1
      %p168 = por %p166, %p167
      %p170 = scmp.ne.s32.totalorder %s155, %s169
      %p171 = scmp.eq.s32.totalorder %s30, 0
      %p172 = por %p170, %p171
      %s174 = sadd.s32 %s173, 1
      %p177 = scmp.eq.s32.totalorder %s24, 1
      %p178 = scmp.ne.s32.totalorder %s173, %s175
      %p179 = scmp.eq.s32.totalorder %s24, 0
      %p180 = por %p178, %p179
      %p181 = scmp.ne.s32.totalorder %s173, %s175
      %p182 = scmp.eq.s32.totalorder %s29, 1
      %p183 = por %p181, %p182
      %p184 = scmp.ne.s32.totalorder %s175, %s176
      %p185 = scmp.eq.s32.totalorder %s29, 0
      %p186 = por %p184, %p185
      %p187 = scmp.ne.s32.totalorder %s175, %s176
      %p188 = scmp.eq.s32.totalorder %s30, 1
      %p189 = por %p187, %p188
      %p191 = scmp.ne.s32.totalorder %s176, %s190
      %p192 = scmp.eq.s32.totalorder %s30, 0
      %p193 = por %p191, %p192
      %s195 = sadd.s32 %s194, 1
      %p198 = scmp.eq.s32.totalorder %s24, 1
      %p199 = scmp.ne.s32.totalorder %s194, %s196
      %p200 = scmp.eq.s32.totalorder %s24, 0
      %p201 = por %p199, %p200
      %p202 = scmp.ne.s32.totalorder %s194, %s196
      %p203 = scmp.eq.s32.totalorder %s29, 1
      %p204 = por %p202, %p203
      %p205 = scmp.ne.s32.totalorder %s196, %s197
      %p206 = scmp.eq.s32.totalorder %s29, 0
      %p207 = por %p205, %p206
      %p208 = scmp.ne.s32.totalorder %s196, %s197
      %p209 = scmp.eq.s32.totalorder %s30, 1
      %p210 = por %p208, %p209
      %p212 = scmp.ne.s32.totalorder %s197, %s211
      %p213 = scmp.eq.s32.totalorder %s30, 0
      %p214 = por %p212, %p213
      %s216 = sadd.s32 %s215, 1
      %p219 = scmp.eq.s32.totalorder %s24, 1
      %p220 = scmp.ne.s32.totalorder %s215, %s217
      %p221 = scmp.eq.s32.totalorder %s24, 0
      %p222 = por %p220, %p221
      %p223 = scmp.ne.s32.totalorder %s215, %s217
      %p224 = scmp.eq.s32.totalorder %s29, 1
      %p225 = por %p223, %p224
      %p226 = scmp.ne.s32.totalorder %s217, %s218
      %p227 = scmp.eq.s32.totalorder %s29, 0
      %p228 = por %p226, %p227
      %p229 = scmp.ne.s32.totalorder %s217, %s218
      %p230 = scmp.eq.s32.totalorder %s30, 1
      %p231 = por %p229, %p230
      %p233 = scmp.ne.s32.totalorder %s218, %s232
      %p234 = scmp.eq.s32.totalorder %s30, 0
      %p235 = por %p233, %p234
      %s236 = ssub.s32 %s24, %s31
      %p237 = scmp.eq.s32.totalorder %s236, 0
      %s239 = sadd.s32 %s238, 1
      %s240 = scalar_select %p237, %s238, %s239
      %p243 = pneg %p237
      %p244 = scmp.eq.s32.totalorder %s24, 1
      %p245 = por %p243, %p244
      %p246 = scmp.ne.s32.totalorder %s238, %s241
      %p247 = scmp.eq.s32.totalorder %s24, 0
      %p248 = por %p246, %p247
      %p249 = scmp.ne.s32.totalorder %s238, %s241
      %p250 = scmp.eq.s32.totalorder %s29, 1
      %p251 = por %p249, %p250
      %p252 = scmp.ne.s32.totalorder %s241, %s242
      %p253 = scmp.eq.s32.totalorder %s29, 0
      %p254 = por %p252, %p253
      %p255 = scmp.ne.s32.totalorder %s241, %s242
      %p256 = scmp.eq.s32.totalorder %s30, 1
      %p257 = por %p255, %p256
      %p259 = scmp.ne.s32.totalorder %s242, %s258
      %p260 = scmp.eq.s32.totalorder %s30, 0
      %p261 = por %p259, %p260
      %p262 = scmp.le.s32.totalorder 1, %s24
      %p263 = scmp.lt.s32.totalorder %s24, 3
      %p264 = pnand %p262, %p263
      %p265 = pneg %p264
      // Predicated region
      $region9: #{tpu_custom_call.1} parent=5 // pred_check
        _
      $region10: #{tpu_custom_call.1} parent=5 // pred_check_branch
        %267 = sbr.rel (%p264) target = $region12
      $region11: #{tpu_custom_call.1} parent=5 // pred_region
        %s268 = ssub.s32 %s24, 1
        // Predicated region
        $region13: #{tpu_custom_call.1} parent=11 // pred_check
          %p269 = pneg %p123
        $region14: #{tpu_custom_call.1} parent=11 // pred_check_branch
          %271 = sbr.rel (%p269) target = $region16
        $region15: #{tpu_custom_call.1} parent=11 // pred_region
          %s273 = ssub.s32 4096, 4096
          %274 = vsyncadd [#allocation7], %s273
          %s275 = sshll.u32 [#allocation6], 4
          %s276 = int_to_ptr.vmem [resolvable:$true] %s275
          %281 = dma.hbm_to_vmem [thread:$0]  %s3, 4096, %s276, [#allocation7], 256, 256, 16
        $region16: #{tpu_custom_call.1} parent=11 // pred_fallthru
          _
        // Predicated region
        $region17: #{tpu_custom_call.1} parent=11 // pred_check
          %p282 = pneg %p144
        $region18: #{tpu_custom_call.1} parent=11 // pred_check_branch
          %284 = sbr.rel (%p282) target = $region20
        $region19: #{tpu_custom_call.1} parent=11 // pred_region
          %s286 = ssub.s32 4096, 4096
          %287 = vsyncadd [#allocation7], %s286
          %s288 = sshll.u32 [#allocation8], 4
          %s289 = int_to_ptr.vmem [resolvable:$true] %s288
          %294 = dma.hbm_to_vmem [thread:$0]  %s4, 4096, %s289, [#allocation7], 256, 256, 16
        $region20: #{tpu_custom_call.1} parent=11 // pred_fallthru
          _
        // Predicated region
        $region21: #{tpu_custom_call.1} parent=11 // pred_check
          %p295 = pneg %p165
        $region22: #{tpu_custom_call.1} parent=11 // pred_check_branch
          %297 = sbr.rel (%p295) target = $region24
        $region23: #{tpu_custom_call.1} parent=11 // pred_region
          _
        $region24: #{tpu_custom_call.1} parent=11 // pred_fallthru
          _
        // Predicated region
        $region25: #{tpu_custom_call.1} parent=11 // pred_check
          %p298 = pneg %p186
        $region26: #{tpu_custom_call.1} parent=11 // pred_check_branch
          %300 = sbr.rel (%p298) target = $region28
        $region27: #{tpu_custom_call.1} parent=11 // pred_region
          _
        $region28: #{tpu_custom_call.1} parent=11 // pred_fallthru
          _
        // Predicated region
        $region29: #{tpu_custom_call.1} parent=11 // pred_check
          %p301 = pneg %p207
        $region30: #{tpu_custom_call.1} parent=11 // pred_check_branch
          %303 = sbr.rel (%p301) target = $region32
        $region31: #{tpu_custom_call.1} parent=11 // pred_region
          _
        $region32: #{tpu_custom_call.1} parent=11 // pred_fallthru
          _
        // Predicated region
        $region33: #{tpu_custom_call.1} parent=11 // pred_check
          %p304 = pneg %p228
        $region34: #{tpu_custom_call.1} parent=11 // pred_check_branch
          %306 = sbr.rel (%p304) target = $region36
        $region35: #{tpu_custom_call.1} parent=11 // pred_region
          _
        $region36: #{tpu_custom_call.1} parent=11 // pred_fallthru
          _
      $region12: #{tpu_custom_call.1} parent=5 // pred_fallthru
        _
      %p307 = scmp.lt.s32.totalorder %s24, 2
      // Predicated region
      $region37: #{tpu_custom_call.1} parent=5 // pred_check
        %p308 = pneg %p307
      $region38: #{tpu_custom_call.1} parent=5 // pred_check_branch
        %310 = sbr.rel (%p308) target = $region40
      $region39: #{tpu_custom_call.1} parent=5 // pred_region
        // Predicated region
        $region41: #{tpu_custom_call.1} parent=39 // pred_check
          %p311 = pneg %p44
        $region42: #{tpu_custom_call.1} parent=39 // pred_check_branch
          %313 = sbr.rel (%p311) target = $region44
        $region43: #{tpu_custom_call.1} parent=39 // pred_region
          %p314 = scmp.lt.s32.totalorder %s24, 1
          %s315 = scalar_select %p314, %s24, 1
          %s316 = smul.addr %s315, 8
          %s317 = scalar_lea.vmem %s0, %s316
        $region44: #{tpu_custom_call.1} parent=39 // pred_fallthru
          _
        // Predicated region
        $region45: #{tpu_custom_call.1} parent=39 // pred_check
          %p318 = pneg %p70
        $region46: #{tpu_custom_call.1} parent=39 // pred_check_branch
          %320 = sbr.rel (%p318) target = $region48
        $region47: #{tpu_custom_call.1} parent=39 // pred_region
          %p321 = scmp.lt.s32.totalorder %s24, 1
          %s322 = scalar_select %p321, %s24, 1
          %s323 = smul.addr %s322, 8
          %s324 = scalar_lea.vmem %s1, %s323
        $region48: #{tpu_custom_call.1} parent=39 // pred_fallthru
          _
        // Predicated region
        $region49: #{tpu_custom_call.1} parent=39 // pred_check
          %p325 = pneg %p96
        $region50: #{tpu_custom_call.1} parent=39 // pred_check_branch
          %327 = sbr.rel (%p325) target = $region52
        $region51: #{tpu_custom_call.1} parent=39 // pred_region
          %s328 = sand.u32 %s86, 1
          %s329 = scalar_lea.sflag [#allocation4], %s328
          %s330 = sand.u32 %s86, 1
          %s331 = smul.addr %s330, 8
          %s332 = scalar_lea.vmem [#allocation3], %s331
          %s334 = ssub.s32 128, 128
          %335 = vsyncadd %s329, %s334
          %s336 = smul.addr %s24, 128
          %s337 = scalar_lea.hbm %s2, %s336
          %s339 = sshll.u32 %s332, 4
          %s340 = int_to_ptr.vmem [resolvable:$true] %s339
          %342 = dma.hbm_to_vmem [thread:$0]  %s337, 128, %s340, %s329
        $region52: #{tpu_custom_call.1} parent=39 // pred_fallthru
          _
      $region40: #{tpu_custom_call.1} parent=5 // pred_fallthru
        _
      %p343 = scmp.le.s32.totalorder 1, %s24
      %p344 = scmp.lt.s32.totalorder %s24, 3
      %p345 = pnand %p343, %p344
      %p346 = pneg %p345
      // Predicated region
      $region53: #{tpu_custom_call.1} parent=5 // pred_check
        _
      $region54: #{tpu_custom_call.1} parent=5 // pred_check_branch
        %348 = sbr.rel (%p345) target = $region56
      $region55: #{tpu_custom_call.1} parent=5 // pred_region
        %s349 = ssub.s32 %s24, 1
        %s350 = sand.u32 %s89, 1
        %s351 = scalar_lea.sflag [#allocation4], %s350
        %s352 = sand.u32 %s89, 1
        %s353 = smul.addr %s352, 8
        %s354 = scalar_lea.vmem [#allocation3], %s353
        // Predicated region
        $region57: #{tpu_custom_call.1} parent=55 // pred_check
          %p355 = pneg %p102
        $region58: #{tpu_custom_call.1} parent=55 // pred_check_branch
          %357 = sbr.rel (%p355) target = $region60
        $region59: #{tpu_custom_call.1} parent=55 // pred_region
          %358 = dma.done %s351, 128
        $region60: #{tpu_custom_call.1} parent=55 // pred_fallthru
          _
        // Predicated region
        $region61: #{tpu_custom_call.1} parent=55 // pred_check
          %p359 = pneg %p123
        $region62: #{tpu_custom_call.1} parent=55 // pred_check_branch
          %361 = sbr.rel (%p359) target = $region64
        $region63: #{tpu_custom_call.1} parent=55 // pred_region
          %362 = dma.done [#allocation7], 4096
        $region64: #{tpu_custom_call.1} parent=55 // pred_fallthru
          _
        // Predicated region
        $region65: #{tpu_custom_call.1} parent=55 // pred_check
          %p363 = pneg %p144
        $region66: #{tpu_custom_call.1} parent=55 // pred_check_branch
          %365 = sbr.rel (%p363) target = $region68
        $region67: #{tpu_custom_call.1} parent=55 // pred_region
          %366 = dma.done [#allocation7], 4096
        $region68: #{tpu_custom_call.1} parent=55 // pred_fallthru
          _
        %p367 = scmp.lt.s32.totalorder %s29, 1
        %s368 = scalar_select %p367, %s29, 1
        %s369 = smul.addr %s368, 8
        %s370 = scalar_lea.vmem %s0, %s369
        %p371 = pneg %p50
        %p372 = pneg %p47
        %p373 = scmp.lt.s32.totalorder %s29, 1
        %s374 = scalar_select %p373, %s29, 1
        %s375 = smul.addr %s374, 8
        %s376 = scalar_lea.vmem %s1, %s375
        %p377 = pneg %p76
        %p378 = pneg %p73
        %s379 = sand.u32 %s89, 1
        %s380 = scalar_lea.sflag [#allocation4], %s379
        %s381 = sand.u32 %s89, 1
        %s382 = smul.addr %s381, 8
        %s383 = scalar_lea.vmem [#allocation3], %s382
        %p384 = pneg %p102
        %p385 = pneg %p99
        %p386 = pneg %p123
        %p387 = pneg %p120
        %p388 = pneg %p144
        %p389 = pneg %p141
        %p390 = pneg %p165
        %p391 = pneg %p162
        %p392 = pneg %p186
        %p393 = pneg %p183
        %p394 = pneg %p207
        %p395 = pneg %p204
        %p396 = pneg %p228
        %p397 = pneg %p225
        %p398 = pneg %p254
        %p399 = pneg %p251
        %s400 = sand.u32 %s241, 1
        %s401 = scalar_lea.sflag [#allocation5], %s400
        %s402 = sand.u32 %s241, 1
        %s403 = smul.addr %s402, 8
        %s404 = scalar_lea.vmem [#allocation9], %s403
        %p405 = scmp.lt.s32.totalorder %s29, 1
        %s406 = scalar_select %p405, %s29, 1
        %s407 = smul.addr %s406, 8
        %s408 = scalar_lea.vmem %s0, %s407
        %p409 = scmp.lt.s32.totalorder %s29, 1
        %s410 = scalar_select %p409, %s29, 1
        %s411 = smul.addr %s410, 8
        %s412 = scalar_lea.vmem %s1, %s411
        %v413 = vld [vmem:[%s354] sm:$0xff]
        %v414 = vld [vmem:[%s408] sm:$0xff]
        %vm415 = vcmp.gt.f32.partialorder %v414, 0.0
        %v416 = vld [vmem:[%s412] sm:$0xff]
        %v417 = vsel %vm415, 1, 0
        %418 = vset.pattern.permute.xlu0 0
        %419 = vperm.xlu0 %418, %v417
        %v420 = vpop.permute.xlu0 %419
        %vm421 = vcmp.eq.s32.totalorder %v420, 1
        %v422 = vsel %vm421, %v416, %v413
        %v423 = vld [vmem:[#allocation6] sm:$0xff]
        %v424 = vld [vmem:[#allocation6 + $0x8] sm:$0xff]
        %v425 = vld [vmem:[#allocation6 + $0x10] sm:$0xff]
        %v426 = vld [vmem:[#allocation6 + $0x18] sm:$0xff]
        %v427 = vld [vmem:[#allocation6 + $0x20] sm:$0xff]
        %v428 = vld [vmem:[#allocation6 + $0x28] sm:$0xff]
        %v429 = vld [vmem:[#allocation6 + $0x30] sm:$0xff]
        %v430 = vld [vmem:[#allocation6 + $0x38] sm:$0xff]
        %v431 = vld [vmem:[#allocation6 + $0x40] sm:$0xff]
        %v432 = vld [vmem:[#allocation6 + $0x48] sm:$0xff]
        %v433 = vld [vmem:[#allocation6 + $0x50] sm:$0xff]
        %v434 = vld [vmem:[#allocation6 + $0x58] sm:$0xff]
        %v435 = vld [vmem:[#allocation6 + $0x60] sm:$0xff]
        %v436 = vld [vmem:[#allocation6 + $0x68] sm:$0xff]
        %v437 = vld [vmem:[#allocation6 + $0x70] sm:$0xff]
        %v438 = vld [vmem:[#allocation6 + $0x78] sm:$0xff]
        %v439 = vld [vmem:[#allocation6 + $0x80] sm:$0xff]
        %v440 = vld [vmem:[#allocation6 + $0x88] sm:$0xff]
        %v441 = vld [vmem:[#allocation6 + $0x90] sm:$0xff]
        %v442 = vld [vmem:[#allocation6 + $0x98] sm:$0xff]
        %v443 = vld [vmem:[#allocation6 + $0xa0] sm:$0xff]
        %v444 = vld [vmem:[#allocation6 + $0xa8] sm:$0xff]
        %v445 = vld [vmem:[#allocation6 + $0xb0] sm:$0xff]
        %v446 = vld [vmem:[#allocation6 + $0xb8] sm:$0xff]
        %v447 = vld [vmem:[#allocation6 + $0xc0] sm:$0xff]
        %v448 = vld [vmem:[#allocation6 + $0xc8] sm:$0xff]
        %v449 = vld [vmem:[#allocation6 + $0xd0] sm:$0xff]
        %v450 = vld [vmem:[#allocation6 + $0xd8] sm:$0xff]
        %v451 = vld [vmem:[#allocation6 + $0xe0] sm:$0xff]
        %v452 = vld [vmem:[#allocation6 + $0xe8] sm:$0xff]
        %v453 = vld [vmem:[#allocation6 + $0xf0] sm:$0xff]
        %v454 = vld [vmem:[#allocation6 + $0xf8] sm:$0xff]
        %455 = vmatprep.subr.mxu0 %v424
        %456 = vmatpush1.msra.mxu0 %v423
        %457 = vmatprep.subr.mxu0 %v426
        %458 = vmatpush1.msra.mxu0 %v425
        %459 = vmatprep.subr.mxu0 %v428
        %460 = vmatpush1.msra.mxu0 %v427
        %461 = vmatprep.subr.mxu0 %v430
        %462 = vmatpush1.msra.mxu0 %v429
        %463 = vmatprep.subr.mxu0 %v432
        %464 = vmatpush1.msra.mxu0 %v431
        %465 = vmatprep.subr.mxu0 %v434
        %466 = vmatpush1.msra.mxu0 %v433
        %467 = vmatprep.subr.mxu0 %v436
        %468 = vmatpush1.msra.mxu0 %v435
        %469 = vmatprep.subr.mxu0 %v438
        %470 = vmatpush1.msra.mxu0 %v437
        %471 = vmatprep.subr.mxu0 %v440
        %472 = vmatpush1.msra.mxu0 %v439
        %473 = vmatprep.subr.mxu0 %v442
        %474 = vmatpush1.msra.mxu0 %v441
        %475 = vmatprep.subr.mxu0 %v444
        %476 = vmatpush1.msra.mxu0 %v443
        %477 = vmatprep.subr.mxu0 %v446
        %478 = vmatpush1.msra.mxu0 %v445
        %479 = vmatprep.subr.mxu0 %v448
        %480 = vmatpush1.msra.mxu0 %v447
        %481 = vmatprep.subr.mxu0 %v450
        %482 = vmatpush1.msra.mxu0 %v449
        %483 = vmatprep.subr.mxu0 %v452
        %484 = vmatpush1.msra.mxu0 %v451
        %485 = vmatprep.subr.mxu0 %v454
        %486 = vmatpush1.msra.mxu0 %v453
        %487 = vmatprep.subr.mxu0 0.0
        %488 = vmatpush1.msra.mxu0 0.0
        %489 = vmatprep.subr.mxu0 0.0
        %490 = vmatpush1.msra.mxu0 0.0
        %491 = vmatprep.subr.mxu0 0.0
        %492 = vmatpush1.msra.mxu0 0.0
        %493 = vmatprep.subr.mxu0 0.0
        %494 = vmatpush1.msra.mxu0 0.0
        %495 = vmatprep.subr.mxu0 0.0
        %496 = vmatpush1.msra.mxu0 0.0
        %497 = vmatprep.subr.mxu0 0.0
        %498 = vmatpush1.msra.mxu0 0.0
        %499 = vmatprep.subr.mxu0 0.0
        %500 = vmatpush1.msra.mxu0 0.0
        %501 = vmatprep.subr.mxu0 0.0
        %502 = vmatpush1.msra.mxu0 0.0
        %503 = vmatprep.subr.mxu0 0.0
        %504 = vmatpush1.msra.mxu0 0.0
        %505 = vmatprep.subr.mxu0 0.0
        %506 = vmatpush1.msra.mxu0 0.0
        %507 = vmatprep.subr.mxu0 0.0
        %508 = vmatpush1.msra.mxu0 0.0
        %509 = vmatprep.subr.mxu0 0.0
        %510 = vmatpush1.msra.mxu0 0.0
        %511 = vmatprep.subr.mxu0 0.0
        %512 = vmatpush1.msra.mxu0 0.0
        %513 = vmatprep.subr.mxu0 0.0
        %514 = vmatpush1.msra.mxu0 0.0
        %515 = vmatprep.subr.mxu0 0.0
        %516 = vmatpush1.msra.mxu0 0.0
        %517 = vmatprep.subr.mxu0 0.0
        %518 = vmatpush1.msra.mxu0 0.0
        %519 = vmatprep.mubr.f32.mxu0 0.0
        %520 = vmatmul.mubr.f32.gmra.mrb[0].mxu0 %v422
        %v521 = vpop.f32.mrb[0].mxu0
        %v522 = vadd.f32 0.0, %v521
        %v523 = vpop.f32.mrb[0].mxu0
        %v524 = vadd.f32 0.0, %v523
        %525 = vdwg.mxu0
        %v526 = vld [vmem:[#allocation8] sm:$0xff]
        %v527 = vld [vmem:[#allocation8 + $0x8] sm:$0xff]
        %v528 = vld [vmem:[#allocation8 + $0x10] sm:$0xff]
        %v529 = vld [vmem:[#allocation8 + $0x18] sm:$0xff]
        %v530 = vld [vmem:[#allocation8 + $0x20] sm:$0xff]
        %v531 = vld [vmem:[#allocation8 + $0x28] sm:$0xff]
        %v532 = vld [vmem:[#allocation8 + $0x30] sm:$0xff]
        %v533 = vld [vmem:[#allocation8 + $0x38] sm:$0xff]
        %v534 = vld [vmem:[#allocation8 + $0x40] sm:$0xff]
        %v535 = vld [vmem:[#allocation8 + $0x48] sm:$0xff]
        %v536 = vld [vmem:[#allocation8 + $0x50] sm:$0xff]
        %v537 = vld [vmem:[#allocation8 + $0x58] sm:$0xff]
        %v538 = vld [vmem:[#allocation8 + $0x60] sm:$0xff]
        %v539 = vld [vmem:[#allocation8 + $0x68] sm:$0xff]
        %v540 = vld [vmem:[#allocation8 + $0x70] sm:$0xff]
        %v541 = vld [vmem:[#allocation8 + $0x78] sm:$0xff]
        %v542 = vld [vmem:[#allocation8 + $0x80] sm:$0xff]
        %v543 = vld [vmem:[#allocation8 + $0x88] sm:$0xff]
        %v544 = vld [vmem:[#allocation8 + $0x90] sm:$0xff]
        %v545 = vld [vmem:[#allocation8 + $0x98] sm:$0xff]
        %v546 = vld [vmem:[#allocation8 + $0xa0] sm:$0xff]
        %v547 = vld [vmem:[#allocation8 + $0xa8] sm:$0xff]
        %v548 = vld [vmem:[#allocation8 + $0xb0] sm:$0xff]
        %v549 = vld [vmem:[#allocation8 + $0xb8] sm:$0xff]
        %v550 = vld [vmem:[#allocation8 + $0xc0] sm:$0xff]
        %v551 = vld [vmem:[#allocation8 + $0xc8] sm:$0xff]
        %v552 = vld [vmem:[#allocation8 + $0xd0] sm:$0xff]
        %v553 = vld [vmem:[#allocation8 + $0xd8] sm:$0xff]
        %v554 = vld [vmem:[#allocation8 + $0xe0] sm:$0xff]
        %v555 = vld [vmem:[#allocation8 + $0xe8] sm:$0xff]
        %v556 = vld [vmem:[#allocation8 + $0xf0] sm:$0xff]
        %v557 = vld [vmem:[#allocation8 + $0xf8] sm:$0xff]
        %558 = vmatprep.subr.mxu0 %v527
        %559 = vmatpush1.msra.mxu0 %v526
        %560 = vmatprep.subr.mxu0 %v529
        %561 = vmatpush1.msra.mxu0 %v528
        %562 = vmatprep.subr.mxu0 %v531
        %563 = vmatpush1.msra.mxu0 %v530
        %564 = vmatprep.subr.mxu0 %v533
        %565 = vmatpush1.msra.mxu0 %v532
        %566 = vmatprep.subr.mxu0 %v535
        %567 = vmatpush1.msra.mxu0 %v534
        %568 = vmatprep.subr.mxu0 %v537
        %569 = vmatpush1.msra.mxu0 %v536
        %570 = vmatprep.subr.mxu0 %v539
        %571 = vmatpush1.msra.mxu0 %v538
        %572 = vmatprep.subr.mxu0 %v541
        %573 = vmatpush1.msra.mxu0 %v540
        %574 = vmatprep.subr.mxu0 %v543
        %575 = vmatpush1.msra.mxu0 %v542
        %576 = vmatprep.subr.mxu0 %v545
        %577 = vmatpush1.msra.mxu0 %v544
        %578 = vmatprep.subr.mxu0 %v547
        %579 = vmatpush1.msra.mxu0 %v546
        %580 = vmatprep.subr.mxu0 %v549
        %581 = vmatpush1.msra.mxu0 %v548
        %582 = vmatprep.subr.mxu0 %v551
        %583 = vmatpush1.msra.mxu0 %v550
        %584 = vmatprep.subr.mxu0 %v553
        %585 = vmatpush1.msra.mxu0 %v552
        %586 = vmatprep.subr.mxu0 %v555
        %587 = vmatpush1.msra.mxu0 %v554
        %588 = vmatprep.subr.mxu0 %v557
        %589 = vmatpush1.msra.mxu0 %v556
        %590 = vmatprep.subr.mxu0 0.0
        %591 = vmatpush1.msra.mxu0 0.0
        %592 = vmatprep.subr.mxu0 0.0
        %593 = vmatpush1.msra.mxu0 0.0
        %594 = vmatprep.subr.mxu0 0.0
        %595 = vmatpush1.msra.mxu0 0.0
        %596 = vmatprep.subr.mxu0 0.0
        %597 = vmatpush1.msra.mxu0 0.0
        %598 = vmatprep.subr.mxu0 0.0
        %599 = vmatpush1.msra.mxu0 0.0
        %600 = vmatprep.subr.mxu0 0.0
        %601 = vmatpush1.msra.mxu0 0.0
        %602 = vmatprep.subr.mxu0 0.0
        %603 = vmatpush1.msra.mxu0 0.0
        %604 = vmatprep.subr.mxu0 0.0
        %605 = vmatpush1.msra.mxu0 0.0
        %606 = vmatprep.subr.mxu0 0.0
        %607 = vmatpush1.msra.mxu0 0.0
        %608 = vmatprep.subr.mxu0 0.0
        %609 = vmatpush1.msra.mxu0 0.0
        %610 = vmatprep.subr.mxu0 0.0
        %611 = vmatpush1.msra.mxu0 0.0
        %612 = vmatprep.subr.mxu0 0.0
        %613 = vmatpush1.msra.mxu0 0.0
        %614 = vmatprep.subr.mxu0 0.0
        %615 = vmatpush1.msra.mxu0 0.0
        %616 = vmatprep.subr.mxu0 0.0
        %617 = vmatpush1.msra.mxu0 0.0
        %618 = vmatprep.subr.mxu0 0.0
        %619 = vmatpush1.msra.mxu0 0.0
        %620 = vmatprep.subr.mxu0 0.0
        %621 = vmatpush1.msra.mxu0 0.0
        %622 = vmatprep.mubr.f32.mxu0 0.0
        %623 = vmatmul.mubr.f32.gmra.mrb[0].mxu0 %v413
        %v624 = vpop.f32.mrb[0].mxu0
        %v625 = vadd.f32 0.0, %v624
        %v626 = vpop.f32.mrb[0].mxu0
        %v627 = vadd.f32 0.0, %v626
        %628 = vdwg.mxu0
        %v629 = vadd.f32 %v522, %v625
        %v630 = vld [vmem:[%s5] sm:$0x1]
        %v632 = vlaneseq
        %v633 = vshrl.u32 %v632, 7
        %v634 = vsub.s32 0, %v633
        %v635 = vrot.slane %v630, %v634
        %v637 = vadd.f32 %v629, %v635
        %v638 = vtanh.pop %v637
        %v639 = vld [vmem:[%s6] sm:$0x1]
        %v641 = vlaneseq
        %v642 = vshrl.u32 %v641, 7
        %v643 = vsub.s32 0, %v642
        %v644 = vrot.slane %v639, %v643
        %v646 = vmul.f32 %v638, %v644
        %647 = vadd.xlane.f32.xlu0 %v646
        %v648 = vpop.xlane.xlu0 %647
        %v649 = vld [vmem:[#allocation2] sm:$0x1]
        %v651 = vlaneseq
        %v652 = vshrl.u32 %v651, 7
        %v653 = vsub.s32 0, %v652
        %v654 = vrot.slane %v649, %v653
        %v656 = vadd.f32 %v648, %v654
        %v657 = vxor.u32 %v656, 2147483648
        %v658 = vmul.f32 %v657, 1.442695
        %v659 = vpow.pop %v658
        %v660 = vadd.f32 %v659, 1.0
        %v661 = vrcp.pop %v660
        %v662 = vmul.f32 1.0, %v661
        %v663 = vsub.f32 1.0, %v662
        %v664 = vsub.f32 %v524, %v627
        %666 = vset.pattern.permute.xlu0 0
        %667 = vperm.xlu0 %666, %v662
        %v668 = vpop.permute.xlu0 %667
        %v670 = vmul.f32 %v668, %v664
        %v671 = vadd.f32 %v627, %v670
        %v672 = vld [vmem:[%s8] sm:$0x1]
        %v674 = vlaneseq
        %v675 = vshrl.u32 %v674, 7
        %v676 = vsub.s32 0, %v675
        %v677 = vrot.slane %v672, %v676
        %v679 = vadd.f32 %v671, %v677
        %v680 = vlaneseq
        %v681 = vand.u32 %v680, 127
        %vm682 = vcmp.eq.s32.totalorder %v681, 7
        %v683 = vsel %vm682, 1, 0
        %v684 = vcvt.s32.f32 %v683
        %vm685 = vcmp.eq.s32.totalorder %v681, 8
        %v686 = vsel %vm685, 1, 0
        %v687 = vcvt.s32.f32 %v686
        %v688 = vmul.f32 %v668, %v684
        %v689 = vadd.f32 %v679, %v688
        %691 = vset.pattern.permute.xlu0 0
        %692 = vperm.xlu0 %691, %v663
        %v693 = vpop.permute.xlu0 %692
        %v695 = vmul.f32 %v693, %v687
        %v696 = vadd.f32 %v689, %v695
        %697 = vst [vmem:[%s404] sm:$0xff] %v696
        %s698 = sand.u32 %s241, 1
        %s699 = scalar_lea.sflag [#allocation5], %s698
        %s700 = sand.u32 %s241, 1
        %s701 = smul.addr %s700, 8
        %s702 = scalar_lea.vmem [#allocation9], %s701
        // Predicated region
        $region69: #{tpu_custom_call.1} parent=55 // pred_check
          %p703 = pneg %p251
        $region70: #{tpu_custom_call.1} parent=55 // pred_check_branch
          %705 = sbr.rel (%p703) target = $region72
        $region71: #{tpu_custom_call.1} parent=55 // pred_region
          %s707 = ssub.s32 128, 128
          %708 = vsyncadd %s699, %s707
          %s709 = smul.addr %s29, 128
          %s710 = scalar_lea.hbm %s9, %s709
          %s712 = sshll.u32 %s702, 4
          %s713 = int_to_ptr.vmem [resolvable:$true] %s712
          %715 = dma.vmem_to_hbm [thread:$0]  %s713, 128, %s710, %s699
        $region72: #{tpu_custom_call.1} parent=55 // pred_fallthru
          _
      $region56: #{tpu_custom_call.1} parent=5 // pred_fallthru
        _
      %p716 = scmp.le.s32.totalorder 2, %s24
      // Predicated region
      $region73: #{tpu_custom_call.1} parent=5 // pred_check
        %p717 = pneg %p716
      $region74: #{tpu_custom_call.1} parent=5 // pred_check_branch
        %719 = sbr.rel (%p717) target = $region76
      $region75: #{tpu_custom_call.1} parent=5 // pred_region
        %s720 = ssub.s32 %s24, 2
        // Predicated region
        $region77: #{tpu_custom_call.1} parent=75 // pred_check
          %p721 = pneg %p257
        $region78: #{tpu_custom_call.1} parent=75 // pred_check_branch
          %723 = sbr.rel (%p721) target = $region80
        $region79: #{tpu_custom_call.1} parent=75 // pred_region
          %s724 = sand.u32 %s242, 1
          %s725 = scalar_lea.sflag [#allocation5], %s724
          %s726 = sand.u32 %s242, 1
          %s727 = smul.addr %s726, 8
          %s728 = scalar_lea.vmem [#allocation9], %s727
          %729 = dma.done %s725, 128
        $region80: #{tpu_custom_call.1} parent=75 // pred_fallthru
          _
      $region76: #{tpu_custom_call.1} parent=5 // pred_fallthru
        _
    $region6: #{tpu_custom_call.1} parent=1 // loop_footer
      %s28 = sadd.s32 1, %s24
    $region7: #{tpu_custom_call.1} parent=1 // loop_footer_branch
      %23 = sbr.rel target = $region3
    $region8: #{tpu_custom_call.1} parent=1 // loop_exit
      _
    %730 = vsyncpa [#allocation4], 1
    %s731 = scalar_lea.sflag [#allocation4], 1
    %732 = vsyncpa %s731, 1
    %733 = vsyncpa [#allocation7], 1
    %734 = vsyncpa [#allocation5], 1
    %s735 = scalar_lea.sflag [#allocation5], 1
    %736 = vsyncpa %s735, 1

</llo_original>
